<compile_context>
chip_gen: v7x
topology: tpu7x:2x2x1
jax: 0.10.0
libtpu: 0.0.40
codegen_flags: <defaults>
</compile_context>

<pallas_src>
import functools
import math

import numpy as np
import jax
import jax.numpy as jnp
from jax.experimental import pallas as pl
from jax.experimental.pallas import tpu as pltpu

HIDDEN_SIZE = 256
NUM_EXPERTS = 4


def _elu(x):
    # ELU with alpha = 1.0 (nn.ELU default), computed in f32.
    # TODO(synk): switch to jnp.expm1 once confirmed supported by the Mosaic lowering
    # (exp(x)-1 has ~1e-7 absolute error, far below the gating softmax's sensitivity).
    return jnp.where(x > 0, x, jnp.exp(x) - 1.0)


def fused_gcn_kernel(xc_ref, w0_ref, b0_ref, w1_ref, b1_ref, w2_ref, b2_ref,
                     bdiag_ref, o_ref, *, num_experts, in_channels):
    """One grid step = one tile of `bn` batch rows; everything stays in VMEM.

    xc_ref    : (bn, C, TV) f32  lane-dense x tile (single DMA of x per tile)
    w0_ref    : (C, TV, H)  bf16 gating layer-0 weight, reshaped per channel
    w1_ref    : (H, H)      bf16
    w2_ref    : (H, K)      bf16
    bX_ref    : (1, H)/(1,K) f32 biases
    bdiag_ref : (K, TV, TV) bf16 per-expert block-diagonal adjacency B_k
    o_ref     : (bn, C, TV) f32  lane-dense output
    """
    C = in_channels
    K = num_experts

    # Per-channel x slices (bn, TV): reused by BOTH the gating MLP and the graph conv.
    x_bf = [xc_ref[:, c, :].astype(jnp.bfloat16) for c in range(C)]

    # ---- gating MLP (MXU, bf16 operands, f32 accumulation) --------------------
    # NOTE: torch forward wraps these layers in nn.Dropout(p=0.7); eval-mode
    # (identity) semantics are implemented here (no stochasticity).
    h = jnp.dot(x_bf[0], w0_ref[0], preferred_element_type=jnp.float32)
    for c in range(1, C):
        h = h + jnp.dot(x_bf[c], w0_ref[c], preferred_element_type=jnp.float32)
    h = _elu(h + b0_ref[...])                                            # (bn, H)
    h = _elu(jnp.dot(h.astype(jnp.bfloat16), w1_ref[...],
                     preferred_element_type=jnp.float32) + b1_ref[...])  # (bn, H)
    logits = jnp.dot(h.astype(jnp.bfloat16), w2_ref[...],
                     preferred_element_type=jnp.float32) + b2_ref[...]   # (bn, K)

    # softmax over the experts axis (dim=1), f32
    m = jnp.max(logits, axis=1, keepdims=True)
    e = jnp.exp(logits - m)
    gw = e / jnp.sum(e, axis=1, keepdims=True)                           # (bn, K)
    gws = [gw[:, k:k + 1] for k in range(K)]                             # (bn, 1) each

    # ---- graph conv: lane-dense MXU matmuls against precomputed B_k, then mix
    # the OUTPUTS with the gating weights on the VPU (linear in A => identical to
    # contracting with the per-sample mixed AS).
    for c in range(C):
        acc = None
        for k in range(K):
            z = jnp.dot(x_bf[c], bdiag_ref[k],
                        preferred_element_type=jnp.float32)              # (bn, TV)
            term = gws[k] * z
            acc = term if acc is None else acc + term
        o_ref[:, c, :] = acc.astype(o_ref.dtype)


def _pick_block_n(N):
    if N <= 8:
        return N
    # >= 2 grid steps so the "parallel" batch axis shards across both v7x
    # TensorCores; cap at 256 rows (multiple of 8) -> a few MiB of VMEM per tile,
    # comfortable on v5e/v6e (128 MiB) and v7x (64 MiB).
    return min(256, ((N + 1) // 2 + 7) // 8 * 8)


def conv_temporal_graphical_forward(x, params, *, block_n=None):
    """x: (N, C, T, V) float32 -> (N, C, T, V) float32."""
    N, C, T, V = x.shape
    TV = T * V
    K = params["A"].shape[0]
    H = params["w0"].shape[1]

    # Layout plumbing only: row-major reshapes, no transposes, no extra HBM passes of x.
    x_ctv = x.reshape(N, C, TV)

    # Precompute the K sample-independent block-diagonal expert matrices:
    #   B_k[t*V+v, s*V+w] = A[k, t, v, w] * [t == s]        (K, TV, TV)
    A = params["A"]
    eye_t = jnp.eye(T, dtype=A.dtype)
    bdiag = (A[:, :, :, None, :] * eye_t[None, :, None, :, None]).reshape(K, TV, TV)

    # bf16 MXU operands (f32 accumulation inside the kernel); biases stay f32.
    w0r = params["w0"].reshape(C, TV, H).astype(jnp.bfloat16)
    w1 = params["w1"].astype(jnp.bfloat16)
    w2 = params["w2"].astype(jnp.bfloat16)
    bdiag = bdiag.astype(jnp.bfloat16)

    bn = block_n if block_n is not None else _pick_block_n(N)
    grid = (pl.cdiv(N, bn),)
    # NOTE: if N % bn != 0 the last tile processes padded rows; they are independent
    # per-row and their (possibly junk) results are masked on the output store.

    kernel = functools.partial(fused_gcn_kernel, num_experts=K, in_channels=C)

    out = pl.pallas_call(
        kernel,
        out_shape=jax.ShapeDtypeStruct((N, C, TV), jnp.float32),
        grid=grid,
        in_specs=[
            pl.BlockSpec((bn, C, TV), lambda i: (i, 0, 0)),      # x tile (single DMA)
            pl.BlockSpec((C, TV, H), lambda i: (0, 0, 0)),       # W0 per channel
            pl.BlockSpec((1, H), lambda i: (0, 0)),              # constants: fetched
            pl.BlockSpec((H, H), lambda i: (0, 0)),              # once, VMEM-resident
            pl.BlockSpec((1, H), lambda i: (0, 0)),
            pl.BlockSpec((H, K), lambda i: (0, 0)),
            pl.BlockSpec((1, K), lambda i: (0, 0)),
            pl.BlockSpec((K, TV, TV), lambda i: (0, 0, 0)),      # B_k
        ],
        out_specs=pl.BlockSpec((bn, C, TV), lambda i: (i, 0, 0)),
        compiler_params=pltpu.CompilerParams(
            dimension_semantics=("parallel",),
            vmem_limit_bytes=32 * 1024 * 1024,
        ),
    )(x_ctv, w0r, params["b0"], w1, params["b1"], w2, params["b2"], bdiag)

    return out.reshape(N, C, T, V)


def init_params(key, time_dim, joints_dim, input_channel):
    """Deterministic synthetic parameters with the same shapes as the module."""
    feature_size = input_channel * time_dim * joints_dim
    ks = jax.random.split(key, 7)

    def linear(kw, kb, fan_in, fan_out):
        bound = 1.0 / math.sqrt(fan_in)
        w = jax.random.uniform(kw, (fan_in, fan_out), jnp.float32, -bound, bound)
        b = jax.random.uniform(kb, (1, fan_out), jnp.float32, -bound, bound)
        return w, b

    w0, b0 = linear(ks[0], ks[1], feature_size, HIDDEN_SIZE)
    w1, b1 = linear(ks[2], ks[3], HIDDEN_SIZE, HIDDEN_SIZE)
    w2, b2 = linear(ks[4], ks[5], HIDDEN_SIZE, NUM_EXPERTS)
    stdv = 1.0 / math.sqrt(joints_dim)             # A.size(2) == joints_dim
    A = jax.random.uniform(
        ks[6], (NUM_EXPERTS, time_dim, joints_dim, joints_dim),
        jnp.float32, -stdv, stdv)
    return dict(w0=w0, b0=b0, w1=w1, b1=b1, w2=w2, b2=b2, A=A)


def reference_forward(x, params):
    """Pure-JAX f32 reference (mirrors the torch forward in eval mode)."""
    N = x.shape[0]
    g = x.reshape(N, -1)
    h = jax.nn.elu(g @ params["w0"] + params["b0"])
    h = jax.nn.elu(h @ params["w1"] + params["b1"])
    h = h @ params["w2"] + params["b2"]
    gw = jax.nn.softmax(h, axis=1)
    AS = jnp.einsum("nk,ktvw->ntvw", gw, params["A"])
    return jnp.einsum("nctv,ntvw->nctw", x, AS)


if __name__ == "__main__":
    # small shapes: batch N=2, input_channel C=4, time_dim T=8, joints_dim V=16 (T*V=128)
    N, C, T, V = 2, 4, 8, 16
    key = jax.random.PRNGKey(0)
    kx, kp = jax.random.split(key)
    x = jax.random.normal(kx, (N, C, T, V), jnp.float32)
    params = init_params(kp, time_dim=T, joints_dim=V, input_channel=C)

    out = conv_temporal_graphical_forward(x, params)
    out = jax.block_until_ready(out)

    ref = reference_forward(x, params)
    assert out.shape == (N, C, T, V), out.shape
    # Tolerance accounts for bf16 MXU operands (f32 accumulation) vs the f32 reference.
    np.testing.assert_allclose(np.asarray(out), np.asarray(ref), atol=5e-2, rtol=5e-2)
    print("KERNEL_OK")
</pallas_src>

<mosaic_0001>
module attributes {stable_mosaic.version = 11 : i64} {
  func.func @fused_gcn_kernel(%arg0: i32, %arg1: memref<2x4x128xf32, #tpu.memory_space<vmem>>, %arg2: memref<4x128x256xbf16, #tpu.memory_space<vmem>>, %arg3: memref<1x256xf32, #tpu.memory_space<vmem>>, %arg4: memref<256x256xbf16, #tpu.memory_space<vmem>>, %arg5: memref<1x256xf32, #tpu.memory_space<vmem>>, %arg6: memref<256x4xbf16, #tpu.memory_space<vmem>>, %arg7: memref<1x4xf32, #tpu.memory_space<vmem>>, %arg8: memref<4x128x128xbf16, #tpu.memory_space<vmem>>, %arg9: memref<2x4x128xf32, #tpu.memory_space<vmem>>) attributes {dimension_semantics = [#tpu.dimension_semantics<parallel>], iteration_bounds = array<i64: 1>, scalar_prefetch = 0 : i64, scratch_operands = 0 : i64, tpu.core_type = #tpu.core_type<tc>, window_params = [{transform_indices = @transform_0, window_bounds = array<i64: 2, 4, 128>}, {pipeline_mode = #tpu.pipeline_mode<synchronous>, transform_indices = @transform_1, window_bounds = array<i64: 4, 128, 256>}, {pipeline_mode = #tpu.pipeline_mode<synchronous>, transform_indices = @transform_2, window_bounds = array<i64: 1, 256>}, {pipeline_mode = #tpu.pipeline_mode<synchronous>, transform_indices = @transform_3, window_bounds = array<i64: 256, 256>}, {pipeline_mode = #tpu.pipeline_mode<synchronous>, transform_indices = @transform_4, window_bounds = array<i64: 1, 256>}, {pipeline_mode = #tpu.pipeline_mode<synchronous>, transform_indices = @transform_5, window_bounds = array<i64: 256, 4>}, {pipeline_mode = #tpu.pipeline_mode<synchronous>, transform_indices = @transform_6, window_bounds = array<i64: 1, 4>}, {pipeline_mode = #tpu.pipeline_mode<synchronous>, transform_indices = @transform_7, window_bounds = array<i64: 4, 128, 128>}, {transform_indices = @transform_8, window_bounds = array<i64: 2, 4, 128>}]} {
    %c0 = arith.constant 0 : index
    %c0_0 = arith.constant 0 : index
    %c0_1 = arith.constant 0 : index
    %0 = vector.load %arg1[%c0, %c0_0, %c0_1] : memref<2x4x128xf32, #tpu.memory_space<vmem>>, vector<2x1x128xf32>
    %1 = vector.shape_cast %0 : vector<2x1x128xf32> to vector<2x128xf32>
    %2 = arith.truncf %1 : vector<2x128xf32> to vector<2x128xbf16>
    %c0_2 = arith.constant 0 : index
    %c1 = arith.constant 1 : index
    %c0_3 = arith.constant 0 : index
    %3 = vector.load %arg1[%c0_2, %c1, %c0_3] : memref<2x4x128xf32, #tpu.memory_space<vmem>>, vector<2x1x128xf32>
    %4 = vector.shape_cast %3 : vector<2x1x128xf32> to vector<2x128xf32>
    %5 = arith.truncf %4 : vector<2x128xf32> to vector<2x128xbf16>
    %c0_4 = arith.constant 0 : index
    %c2 = arith.constant 2 : index
    %c0_5 = arith.constant 0 : index
    %6 = vector.load %arg1[%c0_4, %c2, %c0_5] : memref<2x4x128xf32, #tpu.memory_space<vmem>>, vector<2x1x128xf32>
    %7 = vector.shape_cast %6 : vector<2x1x128xf32> to vector<2x128xf32>
    %8 = arith.truncf %7 : vector<2x128xf32> to vector<2x128xbf16>
    %c0_6 = arith.constant 0 : index
    %c3 = arith.constant 3 : index
    %c0_7 = arith.constant 0 : index
    %9 = vector.load %arg1[%c0_6, %c3, %c0_7] : memref<2x4x128xf32, #tpu.memory_space<vmem>>, vector<2x1x128xf32>
    %10 = vector.shape_cast %9 : vector<2x1x128xf32> to vector<2x128xf32>
    %11 = arith.truncf %10 : vector<2x128xf32> to vector<2x128xbf16>
    %c0_8 = arith.constant 0 : index
    %c0_9 = arith.constant 0 : index
    %c0_10 = arith.constant 0 : index
    %12 = vector.load %arg2[%c0_8, %c0_9, %c0_10] : memref<4x128x256xbf16, #tpu.memory_space<vmem>>, vector<1x128x256xbf16>
    %13 = vector.shape_cast %12 : vector<1x128x256xbf16> to vector<128x256xbf16>
    %cst = arith.constant dense<0.000000e+00> : vector<2x256xf32>
    %14 = tpu.matmul %2, %13, %cst {dimension_numbers = #tpu.dot_dimension_numbers<[1], [0], [0], [1], [0, 0, 1, 1], [], []>} : vector<2x128xbf16>, vector<128x256xbf16>, vector<2x256xf32> -> vector<2x256xf32>
    %c1_11 = arith.constant 1 : index
    %c0_12 = arith.constant 0 : index
    %c0_13 = arith.constant 0 : index
    %15 = vector.load %arg2[%c1_11, %c0_12, %c0_13] : memref<4x128x256xbf16, #tpu.memory_space<vmem>>, vector<1x128x256xbf16>
    %16 = vector.shape_cast %15 : vector<1x128x256xbf16> to vector<128x256xbf16>
    %cst_14 = arith.constant dense<0.000000e+00> : vector<2x256xf32>
    %17 = tpu.matmul %5, %16, %cst_14 {dimension_numbers = #tpu.dot_dimension_numbers<[1], [0], [0], [1], [0, 0, 1, 1], [], []>} : vector<2x128xbf16>, vector<128x256xbf16>, vector<2x256xf32> -> vector<2x256xf32>
    %18 = arith.addf %14, %17 : vector<2x256xf32>
    %c2_15 = arith.constant 2 : index
    %c0_16 = arith.constant 0 : index
    %c0_17 = arith.constant 0 : index
    %19 = vector.load %arg2[%c2_15, %c0_16, %c0_17] : memref<4x128x256xbf16, #tpu.memory_space<vmem>>, vector<1x128x256xbf16>
    %20 = vector.shape_cast %19 : vector<1x128x256xbf16> to vector<128x256xbf16>
    %cst_18 = arith.constant dense<0.000000e+00> : vector<2x256xf32>
    %21 = tpu.matmul %8, %20, %cst_18 {dimension_numbers = #tpu.dot_dimension_numbers<[1], [0], [0], [1], [0, 0, 1, 1], [], []>} : vector<2x128xbf16>, vector<128x256xbf16>, vector<2x256xf32> -> vector<2x256xf32>
    %22 = arith.addf %18, %21 : vector<2x256xf32>
    %c3_19 = arith.constant 3 : index
    %c0_20 = arith.constant 0 : index
    %c0_21 = arith.constant 0 : index
    %23 = vector.load %arg2[%c3_19, %c0_20, %c0_21] : memref<4x128x256xbf16, #tpu.memory_space<vmem>>, vector<1x128x256xbf16>
    %24 = vector.shape_cast %23 : vector<1x128x256xbf16> to vector<128x256xbf16>
    %cst_22 = arith.constant dense<0.000000e+00> : vector<2x256xf32>
    %25 = tpu.matmul %11, %24, %cst_22 {dimension_numbers = #tpu.dot_dimension_numbers<[1], [0], [0], [1], [0, 0, 1, 1], [], []>} : vector<2x128xbf16>, vector<128x256xbf16>, vector<2x256xf32> -> vector<2x256xf32>
    %26 = arith.addf %22, %25 : vector<2x256xf32>
    %c0_23 = arith.constant 0 : index
    %c0_24 = arith.constant 0 : index
    %27 = vector.load %arg3[%c0_23, %c0_24] : memref<1x256xf32, #tpu.memory_space<vmem>>, vector<1x256xf32>
    %28 = vector.broadcast %27 : vector<1x256xf32> to vector<2x256xf32>
    %29 = arith.addf %26, %28 : vector<2x256xf32>
    %cst_25 = arith.constant 0.000000e+00 : f32
    %30 = vector.broadcast %cst_25 : f32 to vector<2x256xf32>
    %31 = arith.cmpf ogt, %29, %30 : vector<2x256xf32>
    %32 = math.exp %29 : vector<2x256xf32>
    %cst_26 = arith.constant 1.000000e+00 : f32
    %33 = vector.broadcast %cst_26 : f32 to vector<2x256xf32>
    %34 = arith.subf %32, %33 : vector<2x256xf32>
    %35 = arith.select %31, %29, %34 : vector<2x256xi1>, vector<2x256xf32>
    %36 = arith.truncf %35 : vector<2x256xf32> to vector<2x256xbf16>
    %c0_27 = arith.constant 0 : index
    %c0_28 = arith.constant 0 : index
    %37 = vector.load %arg4[%c0_27, %c0_28] : memref<256x256xbf16, #tpu.memory_space<vmem>>, vector<256x256xbf16>
    %cst_29 = arith.constant dense<0.000000e+00> : vector<2x256xf32>
    %38 = tpu.matmul %36, %37, %cst_29 {dimension_numbers = #tpu.dot_dimension_numbers<[1], [0], [0], [1], [0, 0, 1, 1], [], []>} : vector<2x256xbf16>, vector<256x256xbf16>, vector<2x256xf32> -> vector<2x256xf32>
    %c0_30 = arith.constant 0 : index
    %c0_31 = arith.constant 0 : index
    %39 = vector.load %arg5[%c0_30, %c0_31] : memref<1x256xf32, #tpu.memory_space<vmem>>, vector<1x256xf32>
    %40 = vector.broadcast %39 : vector<1x256xf32> to vector<2x256xf32>
    %41 = arith.addf %38, %40 : vector<2x256xf32>
    %cst_32 = arith.constant 0.000000e+00 : f32
    %42 = vector.broadcast %cst_32 : f32 to vector<2x256xf32>
    %43 = arith.cmpf ogt, %41, %42 : vector<2x256xf32>
    %44 = math.exp %41 : vector<2x256xf32>
    %cst_33 = arith.constant 1.000000e+00 : f32
    %45 = vector.broadcast %cst_33 : f32 to vector<2x256xf32>
    %46 = arith.subf %44, %45 : vector<2x256xf32>
    %47 = arith.select %43, %41, %46 : vector<2x256xi1>, vector<2x256xf32>
    %48 = arith.truncf %47 : vector<2x256xf32> to vector<2x256xbf16>
    %c0_34 = arith.constant 0 : index
    %c0_35 = arith.constant 0 : index
    %49 = vector.load %arg6[%c0_34, %c0_35] : memref<256x4xbf16, #tpu.memory_space<vmem>>, vector<256x4xbf16>
    %cst_36 = arith.constant dense<0.000000e+00> : vector<2x4xf32>
    %50 = tpu.matmul %48, %49, %cst_36 {dimension_numbers = #tpu.dot_dimension_numbers<[1], [0], [0], [1], [0, 0, 1, 1], [], []>} : vector<2x256xbf16>, vector<256x4xbf16>, vector<2x4xf32> -> vector<2x4xf32>
    %c0_37 = arith.constant 0 : index
    %c0_38 = arith.constant 0 : index
    %51 = vector.load %arg7[%c0_37, %c0_38] : memref<1x4xf32, #tpu.memory_space<vmem>>, vector<1x4xf32>
    %52 = vector.broadcast %51 : vector<1x4xf32> to vector<2x4xf32>
    %53 = arith.addf %50, %52 : vector<2x4xf32>
    %cst_39 = arith.constant dense<0xFF800000> : vector<2xf32>
    %54 = vector.multi_reduction <maximumf>, %53, %cst_39 [1] : vector<2x4xf32> to vector<2xf32>
    %55 = vector.shape_cast %54 : vector<2xf32> to vector<2x1xf32>
    %56 = vector.broadcast %55 : vector<2x1xf32> to vector<2x4xf32>
    %57 = arith.subf %53, %56 : vector<2x4xf32>
    %58 = math.exp %57 : vector<2x4xf32>
    %cst_40 = arith.constant dense<0.000000e+00> : vector<2xf32>
    %59 = vector.multi_reduction <add>, %58, %cst_40 [1] : vector<2x4xf32> to vector<2xf32>
    %60 = vector.shape_cast %59 : vector<2xf32> to vector<2x1xf32>
    %61 = vector.broadcast %60 : vector<2x1xf32> to vector<2x4xf32>
    %62 = arith.divf %58, %61 : vector<2x4xf32>
    %63 = vector.extract_strided_slice %62 {offsets = [0, 0], sizes = [2, 1], strides = [1, 1]} : vector<2x4xf32> to vector<2x1xf32>
    %64 = vector.extract_strided_slice %62 {offsets = [0, 1], sizes = [2, 1], strides = [1, 1]} : vector<2x4xf32> to vector<2x1xf32>
    %65 = vector.extract_strided_slice %62 {offsets = [0, 2], sizes = [2, 1], strides = [1, 1]} : vector<2x4xf32> to vector<2x1xf32>
    %66 = vector.extract_strided_slice %62 {offsets = [0, 3], sizes = [2, 1], strides = [1, 1]} : vector<2x4xf32> to vector<2x1xf32>
    %c0_41 = arith.constant 0 : index
    %c0_42 = arith.constant 0 : index
    %c0_43 = arith.constant 0 : index
    %67 = vector.load %arg8[%c0_41, %c0_42, %c0_43] : memref<4x128x128xbf16, #tpu.memory_space<vmem>>, vector<1x128x128xbf16>
    %68 = vector.shape_cast %67 : vector<1x128x128xbf16> to vector<128x128xbf16>
    %cst_44 = arith.constant dense<0.000000e+00> : vector<2x128xf32>
    %69 = tpu.matmul %2, %68, %cst_44 {dimension_numbers = #tpu.dot_dimension_numbers<[1], [0], [0], [1], [0, 0, 1, 1], [], []>} : vector<2x128xbf16>, vector<128x128xbf16>, vector<2x128xf32> -> vector<2x128xf32>
    %70 = vector.broadcast %63 : vector<2x1xf32> to vector<2x128xf32>
    %71 = arith.mulf %70, %69 : vector<2x128xf32>
    %c1_45 = arith.constant 1 : index
    %c0_46 = arith.constant 0 : index
    %c0_47 = arith.constant 0 : index
    %72 = vector.load %arg8[%c1_45, %c0_46, %c0_47] : memref<4x128x128xbf16, #tpu.memory_space<vmem>>, vector<1x128x128xbf16>
    %73 = vector.shape_cast %72 : vector<1x128x128xbf16> to vector<128x128xbf16>
    %cst_48 = arith.constant dense<0.000000e+00> : vector<2x128xf32>
    %74 = tpu.matmul %2, %73, %cst_48 {dimension_numbers = #tpu.dot_dimension_numbers<[1], [0], [0], [1], [0, 0, 1, 1], [], []>} : vector<2x128xbf16>, vector<128x128xbf16>, vector<2x128xf32> -> vector<2x128xf32>
    %75 = vector.broadcast %64 : vector<2x1xf32> to vector<2x128xf32>
    %76 = arith.mulf %75, %74 : vector<2x128xf32>
    %77 = arith.addf %71, %76 : vector<2x128xf32>
    %c2_49 = arith.constant 2 : index
    %c0_50 = arith.constant 0 : index
    %c0_51 = arith.constant 0 : index
    %78 = vector.load %arg8[%c2_49, %c0_50, %c0_51] : memref<4x128x128xbf16, #tpu.memory_space<vmem>>, vector<1x128x128xbf16>
    %79 = vector.shape_cast %78 : vector<1x128x128xbf16> to vector<128x128xbf16>
    %cst_52 = arith.constant dense<0.000000e+00> : vector<2x128xf32>
    %80 = tpu.matmul %2, %79, %cst_52 {dimension_numbers = #tpu.dot_dimension_numbers<[1], [0], [0], [1], [0, 0, 1, 1], [], []>} : vector<2x128xbf16>, vector<128x128xbf16>, vector<2x128xf32> -> vector<2x128xf32>
    %81 = vector.broadcast %65 : vector<2x1xf32> to vector<2x128xf32>
    %82 = arith.mulf %81, %80 : vector<2x128xf32>
    %83 = arith.addf %77, %82 : vector<2x128xf32>
    %c3_53 = arith.constant 3 : index
    %c0_54 = arith.constant 0 : index
    %c0_55 = arith.constant 0 : index
    %84 = vector.load %arg8[%c3_53, %c0_54, %c0_55] : memref<4x128x128xbf16, #tpu.memory_space<vmem>>, vector<1x128x128xbf16>
    %85 = vector.shape_cast %84 : vector<1x128x128xbf16> to vector<128x128xbf16>
    %cst_56 = arith.constant dense<0.000000e+00> : vector<2x128xf32>
    %86 = tpu.matmul %2, %85, %cst_56 {dimension_numbers = #tpu.dot_dimension_numbers<[1], [0], [0], [1], [0, 0, 1, 1], [], []>} : vector<2x128xbf16>, vector<128x128xbf16>, vector<2x128xf32> -> vector<2x128xf32>
    %87 = vector.broadcast %66 : vector<2x1xf32> to vector<2x128xf32>
    %88 = arith.mulf %87, %86 : vector<2x128xf32>
    %89 = arith.addf %83, %88 : vector<2x128xf32>
    %c0_57 = arith.constant 0 : index
    %c0_58 = arith.constant 0 : index
    %c0_59 = arith.constant 0 : index
    %90 = vector.load %arg9[%c0_57, %c0_58, %c0_59] : memref<2x4x128xf32, #tpu.memory_space<vmem>>, vector<2x1x128xf32>
    %91 = vector.shape_cast %90 : vector<2x1x128xf32> to vector<2x128xf32>
    %92 = vector.shape_cast %89 : vector<2x128xf32> to vector<2x1x128xf32>
    tpu.vector_store %arg9[%c0_57, %c0_58, %c0_59], %92 {strides = array<i32>} : memref<2x4x128xf32, #tpu.memory_space<vmem>>, vector<2x1x128xf32>,
    %c0_60 = arith.constant 0 : index
    %c0_61 = arith.constant 0 : index
    %c0_62 = arith.constant 0 : index
    %93 = vector.load %arg8[%c0_60, %c0_61, %c0_62] : memref<4x128x128xbf16, #tpu.memory_space<vmem>>, vector<1x128x128xbf16>
    %94 = vector.shape_cast %93 : vector<1x128x128xbf16> to vector<128x128xbf16>
    %cst_63 = arith.constant dense<0.000000e+00> : vector<2x128xf32>
    %95 = tpu.matmul %5, %94, %cst_63 {dimension_numbers = #tpu.dot_dimension_numbers<[1], [0], [0], [1], [0, 0, 1, 1], [], []>} : vector<2x128xbf16>, vector<128x128xbf16>, vector<2x128xf32> -> vector<2x128xf32>
    %96 = vector.broadcast %63 : vector<2x1xf32> to vector<2x128xf32>
    %97 = arith.mulf %96, %95 : vector<2x128xf32>
    %c1_64 = arith.constant 1 : index
    %c0_65 = arith.constant 0 : index
    %c0_66 = arith.constant 0 : index
    %98 = vector.load %arg8[%c1_64, %c0_65, %c0_66] : memref<4x128x128xbf16, #tpu.memory_space<vmem>>, vector<1x128x128xbf16>
    %99 = vector.shape_cast %98 : vector<1x128x128xbf16> to vector<128x128xbf16>
    %cst_67 = arith.constant dense<0.000000e+00> : vector<2x128xf32>
    %100 = tpu.matmul %5, %99, %cst_67 {dimension_numbers = #tpu.dot_dimension_numbers<[1], [0], [0], [1], [0, 0, 1, 1], [], []>} : vector<2x128xbf16>, vector<128x128xbf16>, vector<2x128xf32> -> vector<2x128xf32>
    %101 = vector.broadcast %64 : vector<2x1xf32> to vector<2x128xf32>
    %102 = arith.mulf %101, %100 : vector<2x128xf32>
    %103 = arith.addf %97, %102 : vector<2x128xf32>
    %c2_68 = arith.constant 2 : index
    %c0_69 = arith.constant 0 : index
    %c0_70 = arith.constant 0 : index
    %104 = vector.load %arg8[%c2_68, %c0_69, %c0_70] : memref<4x128x128xbf16, #tpu.memory_space<vmem>>, vector<1x128x128xbf16>
    %105 = vector.shape_cast %104 : vector<1x128x128xbf16> to vector<128x128xbf16>
    %cst_71 = arith.constant dense<0.000000e+00> : vector<2x128xf32>
    %106 = tpu.matmul %5, %105, %cst_71 {dimension_numbers = #tpu.dot_dimension_numbers<[1], [0], [0], [1], [0, 0, 1, 1], [], []>} : vector<2x128xbf16>, vector<128x128xbf16>, vector<2x128xf32> -> vector<2x128xf32>
    %107 = vector.broadcast %65 : vector<2x1xf32> to vector<2x128xf32>
    %108 = arith.mulf %107, %106 : vector<2x128xf32>
    %109 = arith.addf %103, %108 : vector<2x128xf32>
    %c3_72 = arith.constant 3 : index
    %c0_73 = arith.constant 0 : index
    %c0_74 = arith.constant 0 : index
    %110 = vector.load %arg8[%c3_72, %c0_73, %c0_74] : memref<4x128x128xbf16, #tpu.memory_space<vmem>>, vector<1x128x128xbf16>
    %111 = vector.shape_cast %110 : vector<1x128x128xbf16> to vector<128x128xbf16>
    %cst_75 = arith.constant dense<0.000000e+00> : vector<2x128xf32>
    %112 = tpu.matmul %5, %111, %cst_75 {dimension_numbers = #tpu.dot_dimension_numbers<[1], [0], [0], [1], [0, 0, 1, 1], [], []>} : vector<2x128xbf16>, vector<128x128xbf16>, vector<2x128xf32> -> vector<2x128xf32>
    %113 = vector.broadcast %66 : vector<2x1xf32> to vector<2x128xf32>
    %114 = arith.mulf %113, %112 : vector<2x128xf32>
    %115 = arith.addf %109, %114 : vector<2x128xf32>
    %c0_76 = arith.constant 0 : index
    %c1_77 = arith.constant 1 : index
    %c0_78 = arith.constant 0 : index
    %116 = vector.load %arg9[%c0_76, %c1_77, %c0_78] : memref<2x4x128xf32, #tpu.memory_space<vmem>>, vector<2x1x128xf32>
    %117 = vector.shape_cast %116 : vector<2x1x128xf32> to vector<2x128xf32>
    %118 = vector.shape_cast %115 : vector<2x128xf32> to vector<2x1x128xf32>
    tpu.vector_store %arg9[%c0_76, %c1_77, %c0_78], %118 {strides = array<i32>} : memref<2x4x128xf32, #tpu.memory_space<vmem>>, vector<2x1x128xf32>,
    %c0_79 = arith.constant 0 : index
    %c0_80 = arith.constant 0 : index
    %c0_81 = arith.constant 0 : index
    %119 = vector.load %arg8[%c0_79, %c0_80, %c0_81] : memref<4x128x128xbf16, #tpu.memory_space<vmem>>, vector<1x128x128xbf16>
    %120 = vector.shape_cast %119 : vector<1x128x128xbf16> to vector<128x128xbf16>
    %cst_82 = arith.constant dense<0.000000e+00> : vector<2x128xf32>
    %121 = tpu.matmul %8, %120, %cst_82 {dimension_numbers = #tpu.dot_dimension_numbers<[1], [0], [0], [1], [0, 0, 1, 1], [], []>} : vector<2x128xbf16>, vector<128x128xbf16>, vector<2x128xf32> -> vector<2x128xf32>
    %122 = vector.broadcast %63 : vector<2x1xf32> to vector<2x128xf32>
    %123 = arith.mulf %122, %121 : vector<2x128xf32>
    %c1_83 = arith.constant 1 : index
    %c0_84 = arith.constant 0 : index
    %c0_85 = arith.constant 0 : index
    %124 = vector.load %arg8[%c1_83, %c0_84, %c0_85] : memref<4x128x128xbf16, #tpu.memory_space<vmem>>, vector<1x128x128xbf16>
    %125 = vector.shape_cast %124 : vector<1x128x128xbf16> to vector<128x128xbf16>
    %cst_86 = arith.constant dense<0.000000e+00> : vector<2x128xf32>
    %126 = tpu.matmul %8, %125, %cst_86 {dimension_numbers = #tpu.dot_dimension_numbers<[1], [0], [0], [1], [0, 0, 1, 1], [], []>} : vector<2x128xbf16>, vector<128x128xbf16>, vector<2x128xf32> -> vector<2x128xf32>
    %127 = vector.broadcast %64 : vector<2x1xf32> to vector<2x128xf32>
    %128 = arith.mulf %127, %126 : vector<2x128xf32>
    %129 = arith.addf %123, %128 : vector<2x128xf32>
    %c2_87 = arith.constant 2 : index
    %c0_88 = arith.constant 0 : index
    %c0_89 = arith.constant 0 : index
    %130 = vector.load %arg8[%c2_87, %c0_88, %c0_89] : memref<4x128x128xbf16, #tpu.memory_space<vmem>>, vector<1x128x128xbf16>
    %131 = vector.shape_cast %130 : vector<1x128x128xbf16> to vector<128x128xbf16>
    %cst_90 = arith.constant dense<0.000000e+00> : vector<2x128xf32>
    %132 = tpu.matmul %8, %131, %cst_90 {dimension_numbers = #tpu.dot_dimension_numbers<[1], [0], [0], [1], [0, 0, 1, 1], [], []>} : vector<2x128xbf16>, vector<128x128xbf16>, vector<2x128xf32> -> vector<2x128xf32>
    %133 = vector.broadcast %65 : vector<2x1xf32> to vector<2x128xf32>
    %134 = arith.mulf %133, %132 : vector<2x128xf32>
    %135 = arith.addf %129, %134 : vector<2x128xf32>
    %c3_91 = arith.constant 3 : index
    %c0_92 = arith.constant 0 : index
    %c0_93 = arith.constant 0 : index
    %136 = vector.load %arg8[%c3_91, %c0_92, %c0_93] : memref<4x128x128xbf16, #tpu.memory_space<vmem>>, vector<1x128x128xbf16>
    %137 = vector.shape_cast %136 : vector<1x128x128xbf16> to vector<128x128xbf16>
    %cst_94 = arith.constant dense<0.000000e+00> : vector<2x128xf32>
    %138 = tpu.matmul %8, %137, %cst_94 {dimension_numbers = #tpu.dot_dimension_numbers<[1], [0], [0], [1], [0, 0, 1, 1], [], []>} : vector<2x128xbf16>, vector<128x128xbf16>, vector<2x128xf32> -> vector<2x128xf32>
    %139 = vector.broadcast %66 : vector<2x1xf32> to vector<2x128xf32>
    %140 = arith.mulf %139, %138 : vector<2x128xf32>
    %141 = arith.addf %135, %140 : vector<2x128xf32>
    %c0_95 = arith.constant 0 : index
    %c2_96 = arith.constant 2 : index
    %c0_97 = arith.constant 0 : index
    %142 = vector.load %arg9[%c0_95, %c2_96, %c0_97] : memref<2x4x128xf32, #tpu.memory_space<vmem>>, vector<2x1x128xf32>
    %143 = vector.shape_cast %142 : vector<2x1x128xf32> to vector<2x128xf32>
    %144 = vector.shape_cast %141 : vector<2x128xf32> to vector<2x1x128xf32>
    tpu.vector_store %arg9[%c0_95, %c2_96, %c0_97], %144 {strides = array<i32>} : memref<2x4x128xf32, #tpu.memory_space<vmem>>, vector<2x1x128xf32>,
    %c0_98 = arith.constant 0 : index
    %c0_99 = arith.constant 0 : index
    %c0_100 = arith.constant 0 : index
    %145 = vector.load %arg8[%c0_98, %c0_99, %c0_100] : memref<4x128x128xbf16, #tpu.memory_space<vmem>>, vector<1x128x128xbf16>
    %146 = vector.shape_cast %145 : vector<1x128x128xbf16> to vector<128x128xbf16>
    %cst_101 = arith.constant dense<0.000000e+00> : vector<2x128xf32>
    %147 = tpu.matmul %11, %146, %cst_101 {dimension_numbers = #tpu.dot_dimension_numbers<[1], [0], [0], [1], [0, 0, 1, 1], [], []>} : vector<2x128xbf16>, vector<128x128xbf16>, vector<2x128xf32> -> vector<2x128xf32>
    %148 = vector.broadcast %63 : vector<2x1xf32> to vector<2x128xf32>
    %149 = arith.mulf %148, %147 : vector<2x128xf32>
    %c1_102 = arith.constant 1 : index
    %c0_103 = arith.constant 0 : index
    %c0_104 = arith.constant 0 : index
    %150 = vector.load %arg8[%c1_102, %c0_103, %c0_104] : memref<4x128x128xbf16, #tpu.memory_space<vmem>>, vector<1x128x128xbf16>
    %151 = vector.shape_cast %150 : vector<1x128x128xbf16> to vector<128x128xbf16>
    %cst_105 = arith.constant dense<0.000000e+00> : vector<2x128xf32>
    %152 = tpu.matmul %11, %151, %cst_105 {dimension_numbers = #tpu.dot_dimension_numbers<[1], [0], [0], [1], [0, 0, 1, 1], [], []>} : vector<2x128xbf16>, vector<128x128xbf16>, vector<2x128xf32> -> vector<2x128xf32>
    %153 = vector.broadcast %64 : vector<2x1xf32> to vector<2x128xf32>
    %154 = arith.mulf %153, %152 : vector<2x128xf32>
    %155 = arith.addf %149, %154 : vector<2x128xf32>
    %c2_106 = arith.constant 2 : index
    %c0_107 = arith.constant 0 : index
    %c0_108 = arith.constant 0 : index
    %156 = vector.load %arg8[%c2_106, %c0_107, %c0_108] : memref<4x128x128xbf16, #tpu.memory_space<vmem>>, vector<1x128x128xbf16>
    %157 = vector.shape_cast %156 : vector<1x128x128xbf16> to vector<128x128xbf16>
    %cst_109 = arith.constant dense<0.000000e+00> : vector<2x128xf32>
    %158 = tpu.matmul %11, %157, %cst_109 {dimension_numbers = #tpu.dot_dimension_numbers<[1], [0], [0], [1], [0, 0, 1, 1], [], []>} : vector<2x128xbf16>, vector<128x128xbf16>, vector<2x128xf32> -> vector<2x128xf32>
    %159 = vector.broadcast %65 : vector<2x1xf32> to vector<2x128xf32>
    %160 = arith.mulf %159, %158 : vector<2x128xf32>
    %161 = arith.addf %155, %160 : vector<2x128xf32>
    %c3_110 = arith.constant 3 : index
    %c0_111 = arith.constant 0 : index
    %c0_112 = arith.constant 0 : index
    %162 = vector.load %arg8[%c3_110, %c0_111, %c0_112] : memref<4x128x128xbf16, #tpu.memory_space<vmem>>, vector<1x128x128xbf16>
    %163 = vector.shape_cast %162 : vector<1x128x128xbf16> to vector<128x128xbf16>
    %cst_113 = arith.constant dense<0.000000e+00> : vector<2x128xf32>
    %164 = tpu.matmul %11, %163, %cst_113 {dimension_numbers = #tpu.dot_dimension_numbers<[1], [0], [0], [1], [0, 0, 1, 1], [], []>} : vector<2x128xbf16>, vector<128x128xbf16>, vector<2x128xf32> -> vector<2x128xf32>
    %165 = vector.broadcast %66 : vector<2x1xf32> to vector<2x128xf32>
    %166 = arith.mulf %165, %164 : vector<2x128xf32>
    %167 = arith.addf %161, %166 : vector<2x128xf32>
    %c0_114 = arith.constant 0 : index
    %c3_115 = arith.constant 3 : index
    %c0_116 = arith.constant 0 : index
    %168 = vector.load %arg9[%c0_114, %c3_115, %c0_116] : memref<2x4x128xf32, #tpu.memory_space<vmem>>, vector<2x1x128xf32>
    %169 = vector.shape_cast %168 : vector<2x1x128xf32> to vector<2x128xf32>
    %170 = vector.shape_cast %167 : vector<2x128xf32> to vector<2x1x128xf32>
    tpu.vector_store %arg9[%c0_114, %c3_115, %c0_116], %170 {strides = array<i32>} : memref<2x4x128xf32, #tpu.memory_space<vmem>>, vector<2x1x128xf32>,
    return
  }
  func.func @transform_0(%arg0: i32) -> (i32, i32, i32) {
    %c0_i32 = arith.constant 0 : i32
    %c0_i32_0 = arith.constant 0 : i32
    %c0_i32_1 = arith.constant 0 : i32
    return %arg0, %c0_i32, %c0_i32_0 : i32, i32, i32
  }
  func.func @transform_1(%arg0: i32) -> (i32, i32, i32) {
    %c0_i32 = arith.constant 0 : i32
    %c0_i32_0 = arith.constant 0 : i32
    %c0_i32_1 = arith.constant 0 : i32
    %c0_i32_2 = arith.constant 0 : i32
    return %c0_i32, %c0_i32_0, %c0_i32_1 : i32, i32, i32
  }
  func.func @transform_2(%arg0: i32) -> (i32, i32) {
    %c0_i32 = arith.constant 0 : i32
    %c0_i32_0 = arith.constant 0 : i32
    %c0_i32_1 = arith.constant 0 : i32
    return %c0_i32, %c0_i32_0 : i32, i32
  }
  func.func @transform_3(%arg0: i32) -> (i32, i32) {
    %c0_i32 = arith.constant 0 : i32
    %c0_i32_0 = arith.constant 0 : i32
    %c0_i32_1 = arith.constant 0 : i32
    return %c0_i32, %c0_i32_0 : i32, i32
  }
  func.func @transform_4(%arg0: i32) -> (i32, i32) {
    %c0_i32 = arith.constant 0 : i32
    %c0_i32_0 = arith.constant 0 : i32
    %c0_i32_1 = arith.constant 0 : i32
    return %c0_i32, %c0_i32_0 : i32, i32
  }
  func.func @transform_5(%arg0: i32) -> (i32, i32) {
    %c0_i32 = arith.constant 0 : i32
    %c0_i32_0 = arith.constant 0 : i32
    %c0_i32_1 = arith.constant 0 : i32
    return %c0_i32, %c0_i32_0 : i32, i32
  }
  func.func @transform_6(%arg0: i32) -> (i32, i32) {
    %c0_i32 = arith.constant 0 : i32
    %c0_i32_0 = arith.constant 0 : i32
    %c0_i32_1 = arith.constant 0 : i32
    return %c0_i32, %c0_i32_0 : i32, i32
  }
  func.func @transform_7(%arg0: i32) -> (i32, i32, i32) {
    %c0_i32 = arith.constant 0 : i32
    %c0_i32_0 = arith.constant 0 : i32
    %c0_i32_1 = arith.constant 0 : i32
    %c0_i32_2 = arith.constant 0 : i32
    return %c0_i32, %c0_i32_0, %c0_i32_1 : i32, i32, i32
  }
  func.func @transform_8(%arg0: i32) -> (i32, i32, i32) {
    %c0_i32 = arith.constant 0 : i32
    %c0_i32_0 = arith.constant 0 : i32
    %c0_i32_1 = arith.constant 0 : i32
    return %arg0, %c0_i32, %c0_i32_0 : i32, i32, i32
  }
}

</mosaic_0001>

<llo_original>
// kernel: tpu_custom_call.1
$region0: #{tpu_custom_call.1}
  #allocation0 [shape = 'u32[]', space=smem, size = 0x4, offset = 0x4, fixed_abs, tag = 'smem constant byte address 0x4 - core index']
  #allocation1 [shape = 'u32[144,128]{1,0:T(1,128)}', space=vmem, size = 0x12000, scoped, tag = 'internal scratch']
  %s0 = inlined_call_operand.vmem [shape: f32[2,4,128], index: 0, kind: input, shape index: {}]
  %s1 = inlined_call_operand.hbm [shape: bf16[4,128,256], index: 1, kind: input, shape index: {}]
  %s2 = inlined_call_operand.vmem [shape: f32[1,256], index: 2, kind: input, shape index: {}]
  %s3 = inlined_call_operand.hbm [shape: bf16[256,256], index: 3, kind: input, shape index: {}]
  %s4 = inlined_call_operand.vmem [shape: f32[1,256], index: 4, kind: input, shape index: {}]
  %s5 = inlined_call_operand.vmem [shape: bf16[256,4], index: 5, kind: input, shape index: {}]
  %s6 = inlined_call_operand.vmem [shape: f32[1,4], index: 6, kind: input, shape index: {}]
  %s7 = inlined_call_operand.hbm [shape: bf16[4,128,128], index: 7, kind: input, shape index: {}]
  %s8 = inlined_call_operand.hbm [shape: f32[2,4,128], index: 8, kind: output, shape index: {}]
  %s9 = sld [smem:[#allocation0]]
  $region54: #{tpu_custom_call.1} parent=0
    _
  %s11 = ssub.s32 1, %s9
  %s12 = scalar_select 0, %s11, %s9
  $region1: #{tpu_custom_call.1} parent=0
    #allocation2 [shape = 'u8[262144]{0}', space=vmem, size = 0x40000, scoped, tag = 'input window, operand 1, single buffered']
    #allocation3 [shape = 's32[1]{0}', space=sflag, size = 0x4, scoped, tag = 'scoped memory for tpu_custom_call.1']
    #allocation4 [shape = 's32[1]{0}', space=sflag, size = 0x4, scoped, tag = 'scoped memory for tpu_custom_call.1']
    #allocation5 [shape = 'u8[131072]{0}', space=vmem, size = 0x20000, scoped, tag = 'input window, operand 3, single buffered']
    #allocation6 [shape = 's32[1]{0}', space=sflag, size = 0x4, scoped, tag = 'scoped memory for tpu_custom_call.1']
    #allocation7 [shape = 'u8[131072]{0}', space=vmem, size = 0x20000, scoped, tag = 'input window, operand 7, single buffered']
    #allocation8 [shape = 'u8[4096]{0}', space=vmem, size = 0x1000, scoped, tag = 'output window, operand 0, single buffered']
    %13 = vsyncpa [#allocation3], 0
    %14 = vsyncpa [#allocation6], 0
    %15 = vsyncpa [#allocation4], 0
    // Predicated region
    $region2: #{tpu_custom_call.1} parent=1 // pred_check
      _
    $region3: #{tpu_custom_call.1} parent=1 // pred_check_branch
      %17 = sbr.rel (0) target = $region5
    $region4: #{tpu_custom_call.1} parent=1 // pred_region
      _
    $region5: #{tpu_custom_call.1} parent=1 // pred_fallthru
      _
    // Predicated region
    $region6: #{tpu_custom_call.1} parent=1 // pred_check
      _
    $region7: #{tpu_custom_call.1} parent=1 // pred_check_branch
      %19 = sbr.rel (0) target = $region9
    $region8: #{tpu_custom_call.1} parent=1 // pred_region
      %s21 = ssub.s32 8192, 8192
      %22 = vsyncadd [#allocation3], %s21
      %s23 = sshll.u32 [#allocation2], 4
      %s24 = int_to_ptr.vmem [resolvable:$true] %s23
      %29 = dma.hbm_to_vmem [thread:$0]  %s1, 8192, %s24, [#allocation3], 128, 128, 8
    $region9: #{tpu_custom_call.1} parent=1 // pred_fallthru
      _
    // Predicated region
    $region10: #{tpu_custom_call.1} parent=1 // pred_check
      _
    $region11: #{tpu_custom_call.1} parent=1 // pred_check_branch
      %31 = sbr.rel (0) target = $region13
    $region12: #{tpu_custom_call.1} parent=1 // pred_region
      _
    $region13: #{tpu_custom_call.1} parent=1 // pred_fallthru
      _
    // Predicated region
    $region14: #{tpu_custom_call.1} parent=1 // pred_check
      _
    $region15: #{tpu_custom_call.1} parent=1 // pred_check_branch
      %33 = sbr.rel (0) target = $region17
    $region16: #{tpu_custom_call.1} parent=1 // pred_region
      %s35 = ssub.s32 4096, 4096
      %36 = vsyncadd [#allocation6], %s35
      %s37 = sshll.u32 [#allocation5], 4
      %s38 = int_to_ptr.vmem [resolvable:$true] %s37
      %43 = dma.hbm_to_vmem [thread:$0]  %s3, 4096, %s38, [#allocation6], 128, 128, 8
    $region17: #{tpu_custom_call.1} parent=1 // pred_fallthru
      _
    // Predicated region
    $region18: #{tpu_custom_call.1} parent=1 // pred_check
      _
    $region19: #{tpu_custom_call.1} parent=1 // pred_check_branch
      %45 = sbr.rel (0) target = $region21
    $region20: #{tpu_custom_call.1} parent=1 // pred_region
      _
    $region21: #{tpu_custom_call.1} parent=1 // pred_fallthru
      _
    // Predicated region
    $region22: #{tpu_custom_call.1} parent=1 // pred_check
      _
    $region23: #{tpu_custom_call.1} parent=1 // pred_check_branch
      %47 = sbr.rel (0) target = $region25
    $region24: #{tpu_custom_call.1} parent=1 // pred_region
      _
    $region25: #{tpu_custom_call.1} parent=1 // pred_fallthru
      _
    // Predicated region
    $region26: #{tpu_custom_call.1} parent=1 // pred_check
      _
    $region27: #{tpu_custom_call.1} parent=1 // pred_check_branch
      %49 = sbr.rel (0) target = $region29
    $region28: #{tpu_custom_call.1} parent=1 // pred_region
      _
    $region29: #{tpu_custom_call.1} parent=1 // pred_fallthru
      _
    // Predicated region
    $region30: #{tpu_custom_call.1} parent=1 // pred_check
      _
    $region31: #{tpu_custom_call.1} parent=1 // pred_check_branch
      %51 = sbr.rel (0) target = $region33
    $region32: #{tpu_custom_call.1} parent=1 // pred_region
      %s53 = ssub.s32 4096, 4096
      %54 = vsyncadd [#allocation6], %s53
      %s55 = sshll.u32 [#allocation7], 4
      %s56 = int_to_ptr.vmem [resolvable:$true] %s55
      %61 = dma.hbm_to_vmem [thread:$0]  %s7, 4096, %s56, [#allocation6], 64, 64, 4
    $region33: #{tpu_custom_call.1} parent=1 // pred_fallthru
      _
    // Predicated region
    $region34: #{tpu_custom_call.1} parent=1 // pred_check
      _
    $region35: #{tpu_custom_call.1} parent=1 // pred_check_branch
      %63 = sbr.rel (0) target = $region37
    $region36: #{tpu_custom_call.1} parent=1 // pred_region
      %64 = dma.done [#allocation3], 8192
    $region37: #{tpu_custom_call.1} parent=1 // pred_fallthru
      _
    // Predicated region
    $region38: #{tpu_custom_call.1} parent=1 // pred_check
      _
    $region39: #{tpu_custom_call.1} parent=1 // pred_check_branch
      %66 = sbr.rel (0) target = $region41
    $region40: #{tpu_custom_call.1} parent=1 // pred_region
      %67 = dma.done [#allocation6], 4096
    $region41: #{tpu_custom_call.1} parent=1 // pred_fallthru
      _
    // Predicated region
    $region42: #{tpu_custom_call.1} parent=1 // pred_check
      _
    $region43: #{tpu_custom_call.1} parent=1 // pred_check_branch
      %69 = sbr.rel (0) target = $region45
    $region44: #{tpu_custom_call.1} parent=1 // pred_region
      %70 = dma.done [#allocation6], 4096
    $region45: #{tpu_custom_call.1} parent=1 // pred_fallthru
      _
    %v72 = vld [vmem:[%s0] sm:$0x1]
    %v73 = vld [vmem:[%s0 + $0x4] sm:$0x1]
    %v74 = vpack.c.bf16 %v72, %v72
    %v75 = vpack.c.bf16 %v73, %v73
    %v76 = vld [vmem:[%s0 + $0x1] sm:$0x1]
    %v77 = vld [vmem:[%s0 + $0x5] sm:$0x1]
    %v78 = vpack.c.bf16 %v76, %v76
    %v79 = vpack.c.bf16 %v77, %v77
    %v80 = vld [vmem:[%s0 + $0x2] sm:$0x1]
    %v81 = vld [vmem:[%s0 + $0x6] sm:$0x1]
    %v82 = vpack.c.bf16 %v80, %v80
    %v83 = vpack.c.bf16 %v81, %v81
    %v84 = vld [vmem:[%s0 + $0x3] sm:$0x1]
    %v85 = vld [vmem:[%s0 + $0x7] sm:$0x1]
    %v86 = vpack.c.bf16 %v84, %v84
    %v87 = vpack.c.bf16 %v85, %v85
    %v88 = vld [vmem:[#allocation2] sm:$0xff]
    %v89 = vld [vmem:[#allocation2 + $0x8] sm:$0xff]
    %v90 = vld [vmem:[#allocation2 + $0x10] sm:$0xff]
    %v91 = vld [vmem:[#allocation2 + $0x18] sm:$0xff]
    %v92 = vld [vmem:[#allocation2 + $0x20] sm:$0xff]
    %v93 = vld [vmem:[#allocation2 + $0x28] sm:$0xff]
    %v94 = vld [vmem:[#allocation2 + $0x30] sm:$0xff]
    %v95 = vld [vmem:[#allocation2 + $0x38] sm:$0xff]
    %v96 = vld [vmem:[#allocation2 + $0x40] sm:$0xff]
    %v97 = vld [vmem:[#allocation2 + $0x48] sm:$0xff]
    %v98 = vld [vmem:[#allocation2 + $0x50] sm:$0xff]
    %v99 = vld [vmem:[#allocation2 + $0x58] sm:$0xff]
    %v100 = vld [vmem:[#allocation2 + $0x60] sm:$0xff]
    %v101 = vld [vmem:[#allocation2 + $0x68] sm:$0xff]
    %v102 = vld [vmem:[#allocation2 + $0x70] sm:$0xff]
    %v103 = vld [vmem:[#allocation2 + $0x78] sm:$0xff]
    %s104 = scalar_lea.vmem [#allocation2], 128
    %v105 = vld [vmem:[%s104] sm:$0xff]
    %v106 = vld [vmem:[%s104 + $0x8] sm:$0xff]
    %v107 = vld [vmem:[%s104 + $0x10] sm:$0xff]
    %v108 = vld [vmem:[%s104 + $0x18] sm:$0xff]
    %v109 = vld [vmem:[%s104 + $0x20] sm:$0xff]
    %v110 = vld [vmem:[%s104 + $0x28] sm:$0xff]
    %v111 = vld [vmem:[%s104 + $0x30] sm:$0xff]
    %v112 = vld [vmem:[%s104 + $0x38] sm:$0xff]
    %v113 = vld [vmem:[%s104 + $0x40] sm:$0xff]
    %v114 = vld [vmem:[%s104 + $0x48] sm:$0xff]
    %v115 = vld [vmem:[%s104 + $0x50] sm:$0xff]
    %v116 = vld [vmem:[%s104 + $0x58] sm:$0xff]
    %v117 = vld [vmem:[%s104 + $0x60] sm:$0xff]
    %v118 = vld [vmem:[%s104 + $0x68] sm:$0xff]
    %v119 = vld [vmem:[%s104 + $0x70] sm:$0xff]
    %v120 = vld [vmem:[%s104 + $0x78] sm:$0xff]
    %v123 = vunpack.c.l.b16 %v78
    %v124 = vunpack.c.l.b16 %v79
    %v125 = vrot.slane %v124, 7
    %vm126 = vcmask 1041409
    %v127 = vsel %vm126, %v125, %v123
    %v128 = vpack.c.b16 %v127, %v127
    %v146 = vunpack.c.l.b16 %v105
    %v147 = vunpack.c.h.b16 %v105
    %v148 = vunpack.c.l.b16 %v106
    %v149 = vunpack.c.h.b16 %v106
    %v150 = vunpack.c.l.b16 %v107
    %v151 = vunpack.c.h.b16 %v107
    %v152 = vunpack.c.l.b16 %v108
    %v153 = vunpack.c.h.b16 %v108
    %v154 = vunpack.c.l.b16 %v109
    %v155 = vunpack.c.h.b16 %v109
    %v156 = vunpack.c.l.b16 %v110
    %v157 = vunpack.c.h.b16 %v110
    %v158 = vunpack.c.l.b16 %v111
    %v159 = vunpack.c.h.b16 %v111
    %v160 = vunpack.c.l.b16 %v112
    %v161 = vunpack.c.h.b16 %v112
    %v162 = vunpack.c.l.b16 %v113
    %v163 = vunpack.c.h.b16 %v113
    %v164 = vunpack.c.l.b16 %v114
    %v165 = vunpack.c.h.b16 %v114
    %v166 = vunpack.c.l.b16 %v115
    %v167 = vunpack.c.h.b16 %v115
    %v168 = vunpack.c.l.b16 %v116
    %v169 = vunpack.c.h.b16 %v116
    %v170 = vunpack.c.l.b16 %v117
    %v171 = vunpack.c.h.b16 %v117
    %v172 = vunpack.c.l.b16 %v118
    %v173 = vunpack.c.h.b16 %v118
    %v174 = vunpack.c.l.b16 %v119
    %v175 = vunpack.c.h.b16 %v119
    %v176 = vunpack.c.l.b16 %v120
    %v177 = vunpack.c.h.b16 %v120
    %v178 = vpack.c.b16 %v148, %v146
    %v179 = vpack.c.b16 %v149, %v147
    %v180 = vpack.c.b16 %v152, %v150
    %v181 = vpack.c.b16 %v153, %v151
    %v182 = vpack.c.b16 %v156, %v154
    %v183 = vpack.c.b16 %v157, %v155
    %v184 = vpack.c.b16 %v160, %v158
    %v185 = vpack.c.b16 %v161, %v159
    %v186 = vpack.c.b16 %v164, %v162
    %v187 = vpack.c.b16 %v165, %v163
    %v188 = vpack.c.b16 %v168, %v166
    %v189 = vpack.c.b16 %v169, %v167
    %v190 = vpack.c.b16 %v172, %v170
    %v191 = vpack.c.b16 %v173, %v171
    %v192 = vpack.c.b16 %v176, %v174
    %v193 = vpack.c.b16 %v177, %v175
    %210 = vmatprep.subr.bf16.mxu0 %v179
    %211 = vmatpush1.bf16.msra.mxu0 %v178
    %212 = vmatprep.subr.bf16.mxu0 %v181
    %213 = vmatpush1.bf16.msra.mxu0 %v180
    %214 = vmatprep.subr.bf16.mxu0 %v183
    %215 = vmatpush1.bf16.msra.mxu0 %v182
    %216 = vmatprep.subr.bf16.mxu0 %v185
    %217 = vmatpush1.bf16.msra.mxu0 %v184
    %218 = vmatprep.subr.bf16.mxu0 %v187
    %219 = vmatpush1.bf16.msra.mxu0 %v186
    %220 = vmatprep.subr.bf16.mxu0 %v189
    %221 = vmatpush1.bf16.msra.mxu0 %v188
    %222 = vmatprep.subr.bf16.mxu0 %v191
    %223 = vmatpush1.bf16.msra.mxu0 %v190
    %224 = vmatprep.subr.bf16.mxu0 %v193
    %225 = vmatpush1.bf16.msra.mxu0 %v192
    %226 = vmatprep.subr.bf16.mxu0 0
    %227 = vmatpush1.bf16.msra.mxu0 0
    %228 = vmatprep.subr.bf16.mxu0 0
    %229 = vmatpush1.bf16.msra.mxu0 0
    %230 = vmatprep.subr.bf16.mxu0 0
    %231 = vmatpush1.bf16.msra.mxu0 0
    %232 = vmatprep.subr.bf16.mxu0 0
    %233 = vmatpush1.bf16.msra.mxu0 0
    %234 = vmatprep.subr.bf16.mxu0 0
    %235 = vmatpush1.bf16.msra.mxu0 0
    %236 = vmatprep.subr.bf16.mxu0 0
    %237 = vmatpush1.bf16.msra.mxu0 0
    %238 = vmatprep.subr.bf16.mxu0 0
    %239 = vmatpush1.bf16.msra.mxu0 0
    %240 = vmatprep.subr.bf16.mxu0 0
    %241 = vmatpush1.bf16.msra.mxu0 0
    %242 = vmatprep.mubr.bf16.mxu0 0
    %243 = vmatmul.mubr.bf16.gmra.mrb[0].mxu0 %v128
    %v244 = vpop.f32.mrb[0].mxu0
    %v245 = vadd.f32 0.0, %v244
    %v246 = vpop.f32.mrb[0].mxu0
    %v247 = vadd.f32 0.0, %v246
    %v248 = vpop.f32.mrb[0].mxu0
    %v249 = vpop.f32.mrb[0].mxu0
    %250 = vdwg.mxu0
    %v253 = vunpack.c.l.b16 %v74
    %v254 = vunpack.c.l.b16 %v75
    %v255 = vrot.slane %v254, 7
    %v256 = vsel %vm126, %v255, %v253
    %v257 = vpack.c.b16 %v256, %v256
    %v275 = vunpack.c.l.b16 %v88
    %v276 = vunpack.c.h.b16 %v88
    %v277 = vunpack.c.l.b16 %v89
    %v278 = vunpack.c.h.b16 %v89
    %v279 = vunpack.c.l.b16 %v90
    %v280 = vunpack.c.h.b16 %v90
    %v281 = vunpack.c.l.b16 %v91
    %v282 = vunpack.c.h.b16 %v91
    %v283 = vunpack.c.l.b16 %v92
    %v284 = vunpack.c.h.b16 %v92
    %v285 = vunpack.c.l.b16 %v93
    %v286 = vunpack.c.h.b16 %v93
    %v287 = vunpack.c.l.b16 %v94
    %v288 = vunpack.c.h.b16 %v94
    %v289 = vunpack.c.l.b16 %v95
    %v290 = vunpack.c.h.b16 %v95
    %v291 = vunpack.c.l.b16 %v96
    %v292 = vunpack.c.h.b16 %v96
    %v293 = vunpack.c.l.b16 %v97
    %v294 = vunpack.c.h.b16 %v97
    %v295 = vunpack.c.l.b16 %v98
    %v296 = vunpack.c.h.b16 %v98
    %v297 = vunpack.c.l.b16 %v99
    %v298 = vunpack.c.h.b16 %v99
    %v299 = vunpack.c.l.b16 %v100
    %v300 = vunpack.c.h.b16 %v100
    %v301 = vunpack.c.l.b16 %v101
    %v302 = vunpack.c.h.b16 %v101
    %v303 = vunpack.c.l.b16 %v102
    %v304 = vunpack.c.h.b16 %v102
    %v305 = vunpack.c.l.b16 %v103
    %v306 = vunpack.c.h.b16 %v103
    %v307 = vpack.c.b16 %v277, %v275
    %v308 = vpack.c.b16 %v278, %v276
    %v309 = vpack.c.b16 %v281, %v279
    %v310 = vpack.c.b16 %v282, %v280
    %v311 = vpack.c.b16 %v285, %v283
    %v312 = vpack.c.b16 %v286, %v284
    %v313 = vpack.c.b16 %v289, %v287
    %v314 = vpack.c.b16 %v290, %v288
    %v315 = vpack.c.b16 %v293, %v291
    %v316 = vpack.c.b16 %v294, %v292
    %v317 = vpack.c.b16 %v297, %v295
    %v318 = vpack.c.b16 %v298, %v296
    %v319 = vpack.c.b16 %v301, %v299
    %v320 = vpack.c.b16 %v302, %v300
    %v321 = vpack.c.b16 %v305, %v303
    %v322 = vpack.c.b16 %v306, %v304
    %339 = vmatprep.subr.bf16.mxu0 %v308
    %340 = vmatpush1.bf16.msra.mxu0 %v307
    %341 = vmatprep.subr.bf16.mxu0 %v310
    %342 = vmatpush1.bf16.msra.mxu0 %v309
    %343 = vmatprep.subr.bf16.mxu0 %v312
    %344 = vmatpush1.bf16.msra.mxu0 %v311
    %345 = vmatprep.subr.bf16.mxu0 %v314
    %346 = vmatpush1.bf16.msra.mxu0 %v313
    %347 = vmatprep.subr.bf16.mxu0 %v316
    %348 = vmatpush1.bf16.msra.mxu0 %v315
    %349 = vmatprep.subr.bf16.mxu0 %v318
    %350 = vmatpush1.bf16.msra.mxu0 %v317
    %351 = vmatprep.subr.bf16.mxu0 %v320
    %352 = vmatpush1.bf16.msra.mxu0 %v319
    %353 = vmatprep.subr.bf16.mxu0 %v322
    %354 = vmatpush1.bf16.msra.mxu0 %v321
    %355 = vmatprep.subr.bf16.mxu0 0
    %356 = vmatpush1.bf16.msra.mxu0 0
    %357 = vmatprep.subr.bf16.mxu0 0
    %358 = vmatpush1.bf16.msra.mxu0 0
    %359 = vmatprep.subr.bf16.mxu0 0
    %360 = vmatpush1.bf16.msra.mxu0 0
    %361 = vmatprep.subr.bf16.mxu0 0
    %362 = vmatpush1.bf16.msra.mxu0 0
    %363 = vmatprep.subr.bf16.mxu0 0
    %364 = vmatpush1.bf16.msra.mxu0 0
    %365 = vmatprep.subr.bf16.mxu0 0
    %366 = vmatpush1.bf16.msra.mxu0 0
    %367 = vmatprep.subr.bf16.mxu0 0
    %368 = vmatpush1.bf16.msra.mxu0 0
    %369 = vmatprep.subr.bf16.mxu0 0
    %370 = vmatpush1.bf16.msra.mxu0 0
    %371 = vmatprep.mubr.bf16.mxu0 0
    %372 = vmatmul.mubr.bf16.gmra.mrb[0].mxu0 %v257
    %v373 = vpop.f32.mrb[0].mxu0
    %v374 = vadd.f32 %v245, %v373
    %v375 = vpop.f32.mrb[0].mxu0
    %v376 = vadd.f32 %v247, %v375
    %v377 = vpop.f32.mrb[0].mxu0
    %v378 = vpop.f32.mrb[0].mxu0
    %379 = vdwg.mxu0
    %s380 = scalar_lea.vmem [#allocation2], 256
    %v381 = vld [vmem:[%s380] sm:$0xff]
    %v382 = vld [vmem:[%s380 + $0x8] sm:$0xff]
    %v383 = vld [vmem:[%s380 + $0x10] sm:$0xff]
    %v384 = vld [vmem:[%s380 + $0x18] sm:$0xff]
    %v385 = vld [vmem:[%s380 + $0x20] sm:$0xff]
    %v386 = vld [vmem:[%s380 + $0x28] sm:$0xff]
    %v387 = vld [vmem:[%s380 + $0x30] sm:$0xff]
    %v388 = vld [vmem:[%s380 + $0x38] sm:$0xff]
    %v389 = vld [vmem:[%s380 + $0x40] sm:$0xff]
    %v390 = vld [vmem:[%s380 + $0x48] sm:$0xff]
    %v391 = vld [vmem:[%s380 + $0x50] sm:$0xff]
    %v392 = vld [vmem:[%s380 + $0x58] sm:$0xff]
    %v393 = vld [vmem:[%s380 + $0x60] sm:$0xff]
    %v394 = vld [vmem:[%s380 + $0x68] sm:$0xff]
    %v395 = vld [vmem:[%s380 + $0x70] sm:$0xff]
    %v396 = vld [vmem:[%s380 + $0x78] sm:$0xff]
    %v399 = vunpack.c.l.b16 %v82
    %v400 = vunpack.c.l.b16 %v83
    %v401 = vrot.slane %v400, 7
    %v402 = vsel %vm126, %v401, %v399
    %v403 = vpack.c.b16 %v402, %v402
    %v421 = vunpack.c.l.b16 %v381
    %v422 = vunpack.c.h.b16 %v381
    %v423 = vunpack.c.l.b16 %v382
    %v424 = vunpack.c.h.b16 %v382
    %v425 = vunpack.c.l.b16 %v383
    %v426 = vunpack.c.h.b16 %v383
    %v427 = vunpack.c.l.b16 %v384
    %v428 = vunpack.c.h.b16 %v384
    %v429 = vunpack.c.l.b16 %v385
    %v430 = vunpack.c.h.b16 %v385
    %v431 = vunpack.c.l.b16 %v386
    %v432 = vunpack.c.h.b16 %v386
    %v433 = vunpack.c.l.b16 %v387
    %v434 = vunpack.c.h.b16 %v387
    %v435 = vunpack.c.l.b16 %v388
    %v436 = vunpack.c.h.b16 %v388
    %v437 = vunpack.c.l.b16 %v389
    %v438 = vunpack.c.h.b16 %v389
    %v439 = vunpack.c.l.b16 %v390
    %v440 = vunpack.c.h.b16 %v390
    %v441 = vunpack.c.l.b16 %v391
    %v442 = vunpack.c.h.b16 %v391
    %v443 = vunpack.c.l.b16 %v392
    %v444 = vunpack.c.h.b16 %v392
    %v445 = vunpack.c.l.b16 %v393
    %v446 = vunpack.c.h.b16 %v393
    %v447 = vunpack.c.l.b16 %v394
    %v448 = vunpack.c.h.b16 %v394
    %v449 = vunpack.c.l.b16 %v395
    %v450 = vunpack.c.h.b16 %v395
    %v451 = vunpack.c.l.b16 %v396
    %v452 = vunpack.c.h.b16 %v396
    %v453 = vpack.c.b16 %v423, %v421
    %v454 = vpack.c.b16 %v424, %v422
    %v455 = vpack.c.b16 %v427, %v425
    %v456 = vpack.c.b16 %v428, %v426
    %v457 = vpack.c.b16 %v431, %v429
    %v458 = vpack.c.b16 %v432, %v430
    %v459 = vpack.c.b16 %v435, %v433
    %v460 = vpack.c.b16 %v436, %v434
    %v461 = vpack.c.b16 %v439, %v437
    %v462 = vpack.c.b16 %v440, %v438
    %v463 = vpack.c.b16 %v443, %v441
    %v464 = vpack.c.b16 %v444, %v442
    %v465 = vpack.c.b16 %v447, %v445
    %v466 = vpack.c.b16 %v448, %v446
    %v467 = vpack.c.b16 %v451, %v449
    %v468 = vpack.c.b16 %v452, %v450
    %485 = vmatprep.subr.bf16.mxu0 %v454
    %486 = vmatpush1.bf16.msra.mxu0 %v453
    %487 = vmatprep.subr.bf16.mxu0 %v456
    %488 = vmatpush1.bf16.msra.mxu0 %v455
    %489 = vmatprep.subr.bf16.mxu0 %v458
    %490 = vmatpush1.bf16.msra.mxu0 %v457
    %491 = vmatprep.subr.bf16.mxu0 %v460
    %492 = vmatpush1.bf16.msra.mxu0 %v459
    %493 = vmatprep.subr.bf16.mxu0 %v462
    %494 = vmatpush1.bf16.msra.mxu0 %v461
    %495 = vmatprep.subr.bf16.mxu0 %v464
    %496 = vmatpush1.bf16.msra.mxu0 %v463
    %497 = vmatprep.subr.bf16.mxu0 %v466
    %498 = vmatpush1.bf16.msra.mxu0 %v465
    %499 = vmatprep.subr.bf16.mxu0 %v468
    %500 = vmatpush1.bf16.msra.mxu0 %v467
    %501 = vmatprep.subr.bf16.mxu0 0
    %502 = vmatpush1.bf16.msra.mxu0 0
    %503 = vmatprep.subr.bf16.mxu0 0
    %504 = vmatpush1.bf16.msra.mxu0 0
    %505 = vmatprep.subr.bf16.mxu0 0
    %506 = vmatpush1.bf16.msra.mxu0 0
    %507 = vmatprep.subr.bf16.mxu0 0
    %508 = vmatpush1.bf16.msra.mxu0 0
    %509 = vmatprep.subr.bf16.mxu0 0
    %510 = vmatpush1.bf16.msra.mxu0 0
    %511 = vmatprep.subr.bf16.mxu0 0
    %512 = vmatpush1.bf16.msra.mxu0 0
    %513 = vmatprep.subr.bf16.mxu0 0
    %514 = vmatpush1.bf16.msra.mxu0 0
    %515 = vmatprep.subr.bf16.mxu0 0
    %516 = vmatpush1.bf16.msra.mxu0 0
    %517 = vmatprep.mubr.bf16.mxu0 0
    %518 = vmatmul.mubr.bf16.gmra.mrb[0].mxu0 %v403
    %v519 = vpop.f32.mrb[0].mxu0
    %v520 = vadd.f32 0.0, %v519
    %v521 = vpop.f32.mrb[0].mxu0
    %v522 = vadd.f32 0.0, %v521
    %v523 = vpop.f32.mrb[0].mxu0
    %v524 = vpop.f32.mrb[0].mxu0
    %525 = vdwg.mxu0
    %v526 = vadd.f32 %v374, %v520
    %v527 = vadd.f32 %v376, %v522
    %s528 = scalar_lea.vmem [#allocation2], 384
    %v529 = vld [vmem:[%s528] sm:$0xff]
    %v530 = vld [vmem:[%s528 + $0x8] sm:$0xff]
    %v531 = vld [vmem:[%s528 + $0x10] sm:$0xff]
    %v532 = vld [vmem:[%s528 + $0x18] sm:$0xff]
    %v533 = vld [vmem:[%s528 + $0x20] sm:$0xff]
    %v534 = vld [vmem:[%s528 + $0x28] sm:$0xff]
    %v535 = vld [vmem:[%s528 + $0x30] sm:$0xff]
    %v536 = vld [vmem:[%s528 + $0x38] sm:$0xff]
    %v537 = vld [vmem:[%s528 + $0x40] sm:$0xff]
    %v538 = vld [vmem:[%s528 + $0x48] sm:$0xff]
    %v539 = vld [vmem:[%s528 + $0x50] sm:$0xff]
    %v540 = vld [vmem:[%s528 + $0x58] sm:$0xff]
    %v541 = vld [vmem:[%s528 + $0x60] sm:$0xff]
    %v542 = vld [vmem:[%s528 + $0x68] sm:$0xff]
    %v543 = vld [vmem:[%s528 + $0x70] sm:$0xff]
    %v544 = vld [vmem:[%s528 + $0x78] sm:$0xff]
    %v547 = vunpack.c.l.b16 %v86
    %v548 = vunpack.c.l.b16 %v87
    %v549 = vrot.slane %v548, 7
    %v550 = vsel %vm126, %v549, %v547
    %v551 = vpack.c.b16 %v550, %v550
    %v569 = vunpack.c.l.b16 %v529
    %v570 = vunpack.c.h.b16 %v529
    %v571 = vunpack.c.l.b16 %v530
    %v572 = vunpack.c.h.b16 %v530
    %v573 = vunpack.c.l.b16 %v531
    %v574 = vunpack.c.h.b16 %v531
    %v575 = vunpack.c.l.b16 %v532
    %v576 = vunpack.c.h.b16 %v532
    %v577 = vunpack.c.l.b16 %v533
    %v578 = vunpack.c.h.b16 %v533
    %v579 = vunpack.c.l.b16 %v534
    %v580 = vunpack.c.h.b16 %v534
    %v581 = vunpack.c.l.b16 %v535
    %v582 = vunpack.c.h.b16 %v535
    %v583 = vunpack.c.l.b16 %v536
    %v584 = vunpack.c.h.b16 %v536
    %v585 = vunpack.c.l.b16 %v537
    %v586 = vunpack.c.h.b16 %v537
    %v587 = vunpack.c.l.b16 %v538
    %v588 = vunpack.c.h.b16 %v538
    %v589 = vunpack.c.l.b16 %v539
    %v590 = vunpack.c.h.b16 %v539
    %v591 = vunpack.c.l.b16 %v540
    %v592 = vunpack.c.h.b16 %v540
    %v593 = vunpack.c.l.b16 %v541
    %v594 = vunpack.c.h.b16 %v541
    %v595 = vunpack.c.l.b16 %v542
    %v596 = vunpack.c.h.b16 %v542
    %v597 = vunpack.c.l.b16 %v543
    %v598 = vunpack.c.h.b16 %v543
    %v599 = vunpack.c.l.b16 %v544
    %v600 = vunpack.c.h.b16 %v544
    %v601 = vpack.c.b16 %v571, %v569
    %v602 = vpack.c.b16 %v572, %v570
    %v603 = vpack.c.b16 %v575, %v573
    %v604 = vpack.c.b16 %v576, %v574
    %v605 = vpack.c.b16 %v579, %v577
    %v606 = vpack.c.b16 %v580, %v578
    %v607 = vpack.c.b16 %v583, %v581
    %v608 = vpack.c.b16 %v584, %v582
    %v609 = vpack.c.b16 %v587, %v585
    %v610 = vpack.c.b16 %v588, %v586
    %v611 = vpack.c.b16 %v591, %v589
    %v612 = vpack.c.b16 %v592, %v590
    %v613 = vpack.c.b16 %v595, %v593
    %v614 = vpack.c.b16 %v596, %v594
    %v615 = vpack.c.b16 %v599, %v597
    %v616 = vpack.c.b16 %v600, %v598
    %633 = vmatprep.subr.bf16.mxu0 %v602
    %634 = vmatpush1.bf16.msra.mxu0 %v601
    %635 = vmatprep.subr.bf16.mxu0 %v604
    %636 = vmatpush1.bf16.msra.mxu0 %v603
    %637 = vmatprep.subr.bf16.mxu0 %v606
    %638 = vmatpush1.bf16.msra.mxu0 %v605
    %639 = vmatprep.subr.bf16.mxu0 %v608
    %640 = vmatpush1.bf16.msra.mxu0 %v607
    %641 = vmatprep.subr.bf16.mxu0 %v610
    %642 = vmatpush1.bf16.msra.mxu0 %v609
    %643 = vmatprep.subr.bf16.mxu0 %v612
    %644 = vmatpush1.bf16.msra.mxu0 %v611
    %645 = vmatprep.subr.bf16.mxu0 %v614
    %646 = vmatpush1.bf16.msra.mxu0 %v613
    %647 = vmatprep.subr.bf16.mxu0 %v616
    %648 = vmatpush1.bf16.msra.mxu0 %v615
    %649 = vmatprep.subr.bf16.mxu0 0
    %650 = vmatpush1.bf16.msra.mxu0 0
    %651 = vmatprep.subr.bf16.mxu0 0
    %652 = vmatpush1.bf16.msra.mxu0 0
    %653 = vmatprep.subr.bf16.mxu0 0
    %654 = vmatpush1.bf16.msra.mxu0 0
    %655 = vmatprep.subr.bf16.mxu0 0
    %656 = vmatpush1.bf16.msra.mxu0 0
    %657 = vmatprep.subr.bf16.mxu0 0
    %658 = vmatpush1.bf16.msra.mxu0 0
    %659 = vmatprep.subr.bf16.mxu0 0
    %660 = vmatpush1.bf16.msra.mxu0 0
    %661 = vmatprep.subr.bf16.mxu0 0
    %662 = vmatpush1.bf16.msra.mxu0 0
    %663 = vmatprep.subr.bf16.mxu0 0
    %664 = vmatpush1.bf16.msra.mxu0 0
    %665 = vmatprep.mubr.bf16.mxu0 0
    %666 = vmatmul.mubr.bf16.gmra.mrb[0].mxu0 %v551
    %v667 = vpop.f32.mrb[0].mxu0
    %v668 = vadd.f32 0.0, %v667
    %v669 = vpop.f32.mrb[0].mxu0
    %v670 = vadd.f32 0.0, %v669
    %v671 = vpop.f32.mrb[0].mxu0
    %v672 = vpop.f32.mrb[0].mxu0
    %673 = vdwg.mxu0
    %v674 = vadd.f32 %v526, %v668
    %v675 = vadd.f32 %v527, %v670
    %v676 = vld [vmem:[%s2] sm:$0x3]
    %v678 = vlaneseq
    %v679 = vshrl.u32 %v678, 7
    %v680 = vsub.s32 0, %v679
    %v681 = vrot.slane %v676, %v680
    %v682 = vlaneseq
    %v683 = vshrl.u32 %v682, 7
    %v684 = vsub.s32 1, %v683
    %v685 = vrot.slane %v676, %v684
    %v688 = vadd.f32 %v674, %v681
    %v689 = vadd.f32 %v675, %v685
    %vm690 = vcmp.gt.f32.partialorder %v688, 0.0
    %vm691 = vcmp.gt.f32.partialorder %v689, 0.0
    %v692 = vmul.f32 %v688, 1.442695
    %v693 = vpow.pop %v692
    %v694 = vmul.f32 %v689, 1.442695
    %v695 = vpow.pop %v694
    %v696 = vsub.f32 %v693, 1.0
    %v697 = vsub.f32 %v695, 1.0
    %v698 = vsel %vm690, %v688, %v696
    %v699 = vsel %vm691, %v689, %v697
    %v700 = vpack.c.bf16 %v698, %v698
    %v701 = vpack.c.bf16 %v699, %v699
    %v702 = vld [vmem:[#allocation5] sm:$0xff]
    %v703 = vld [vmem:[#allocation5 + $0x8] sm:$0xff]
    %v704 = vld [vmem:[#allocation5 + $0x10] sm:$0xff]
    %v705 = vld [vmem:[#allocation5 + $0x18] sm:$0xff]
    %v706 = vld [vmem:[#allocation5 + $0x20] sm:$0xff]
    %v707 = vld [vmem:[#allocation5 + $0x28] sm:$0xff]
    %v708 = vld [vmem:[#allocation5 + $0x30] sm:$0xff]
    %v709 = vld [vmem:[#allocation5 + $0x38] sm:$0xff]
    %v710 = vld [vmem:[#allocation5 + $0x40] sm:$0xff]
    %v711 = vld [vmem:[#allocation5 + $0x48] sm:$0xff]
    %v712 = vld [vmem:[#allocation5 + $0x50] sm:$0xff]
    %v713 = vld [vmem:[#allocation5 + $0x58] sm:$0xff]
    %v714 = vld [vmem:[#allocation5 + $0x60] sm:$0xff]
    %v715 = vld [vmem:[#allocation5 + $0x68] sm:$0xff]
    %v716 = vld [vmem:[#allocation5 + $0x70] sm:$0xff]
    %v717 = vld [vmem:[#allocation5 + $0x78] sm:$0xff]
    %v718 = vld [vmem:[#allocation5 + $0x80] sm:$0xff]
    %v719 = vld [vmem:[#allocation5 + $0x88] sm:$0xff]
    %v720 = vld [vmem:[#allocation5 + $0x90] sm:$0xff]
    %v721 = vld [vmem:[#allocation5 + $0x98] sm:$0xff]
    %v722 = vld [vmem:[#allocation5 + $0xa0] sm:$0xff]
    %v723 = vld [vmem:[#allocation5 + $0xa8] sm:$0xff]
    %v724 = vld [vmem:[#allocation5 + $0xb0] sm:$0xff]
    %v725 = vld [vmem:[#allocation5 + $0xb8] sm:$0xff]
    %v726 = vld [vmem:[#allocation5 + $0xc0] sm:$0xff]
    %v727 = vld [vmem:[#allocation5 + $0xc8] sm:$0xff]
    %v728 = vld [vmem:[#allocation5 + $0xd0] sm:$0xff]
    %v729 = vld [vmem:[#allocation5 + $0xd8] sm:$0xff]
    %v730 = vld [vmem:[#allocation5 + $0xe0] sm:$0xff]
    %v731 = vld [vmem:[#allocation5 + $0xe8] sm:$0xff]
    %v732 = vld [vmem:[#allocation5 + $0xf0] sm:$0xff]
    %v733 = vld [vmem:[#allocation5 + $0xf8] sm:$0xff]
    %v734 = vld [vmem:[%s4] sm:$0x3]
    %v736 = vlaneseq
    %v737 = vshrl.u32 %v736, 7
    %v738 = vsub.s32 0, %v737
    %v739 = vrot.slane %v734, %v738
    %v740 = vlaneseq
    %v741 = vshrl.u32 %v740, 7
    %v742 = vsub.s32 1, %v741
    %v743 = vrot.slane %v734, %v742
    %v778 = vunpack.c.l.b16 %v702
    %v779 = vunpack.c.h.b16 %v702
    %v780 = vunpack.c.l.b16 %v703
    %v781 = vunpack.c.h.b16 %v703
    %v782 = vunpack.c.l.b16 %v704
    %v783 = vunpack.c.h.b16 %v704
    %v784 = vunpack.c.l.b16 %v705
    %v785 = vunpack.c.h.b16 %v705
    %v786 = vunpack.c.l.b16 %v706
    %v787 = vunpack.c.h.b16 %v706
    %v788 = vunpack.c.l.b16 %v707
    %v789 = vunpack.c.h.b16 %v707
    %v790 = vunpack.c.l.b16 %v708
    %v791 = vunpack.c.h.b16 %v708
    %v792 = vunpack.c.l.b16 %v709
    %v793 = vunpack.c.h.b16 %v709
    %v794 = vunpack.c.l.b16 %v710
    %v795 = vunpack.c.h.b16 %v710
    %v796 = vunpack.c.l.b16 %v711
    %v797 = vunpack.c.h.b16 %v711
    %v798 = vunpack.c.l.b16 %v712
    %v799 = vunpack.c.h.b16 %v712
    %v800 = vunpack.c.l.b16 %v713
    %v801 = vunpack.c.h.b16 %v713
    %v802 = vunpack.c.l.b16 %v714
    %v803 = vunpack.c.h.b16 %v714
    %v804 = vunpack.c.l.b16 %v715
    %v805 = vunpack.c.h.b16 %v715
    %v806 = vunpack.c.l.b16 %v716
    %v807 = vunpack.c.h.b16 %v716
    %v808 = vunpack.c.l.b16 %v717
    %v809 = vunpack.c.h.b16 %v717
    %v810 = vunpack.c.l.b16 %v718
    %v811 = vunpack.c.h.b16 %v718
    %v812 = vunpack.c.l.b16 %v719
    %v813 = vunpack.c.h.b16 %v719
    %v814 = vunpack.c.l.b16 %v720
    %v815 = vunpack.c.h.b16 %v720
    %v816 = vunpack.c.l.b16 %v721
    %v817 = vunpack.c.h.b16 %v721
    %v818 = vunpack.c.l.b16 %v722
    %v819 = vunpack.c.h.b16 %v722
    %v820 = vunpack.c.l.b16 %v723
    %v821 = vunpack.c.h.b16 %v723
    %v822 = vunpack.c.l.b16 %v724
    %v823 = vunpack.c.h.b16 %v724
    %v824 = vunpack.c.l.b16 %v725
    %v825 = vunpack.c.h.b16 %v725
    %v826 = vunpack.c.l.b16 %v726
    %v827 = vunpack.c.h.b16 %v726
    %v828 = vunpack.c.l.b16 %v727
    %v829 = vunpack.c.h.b16 %v727
    %v830 = vunpack.c.l.b16 %v728
    %v831 = vunpack.c.h.b16 %v728
    %v832 = vunpack.c.l.b16 %v729
    %v833 = vunpack.c.h.b16 %v729
    %v834 = vunpack.c.l.b16 %v730
    %v835 = vunpack.c.h.b16 %v730
    %v836 = vunpack.c.l.b16 %v731
    %v837 = vunpack.c.h.b16 %v731
    %v838 = vunpack.c.l.b16 %v732
    %v839 = vunpack.c.h.b16 %v732
    %v840 = vunpack.c.l.b16 %v733
    %v841 = vunpack.c.h.b16 %v733
    %v842 = vpack.c.b16 %v780, %v778
    %v843 = vpack.c.b16 %v781, %v779
    %v844 = vpack.c.b16 %v784, %v782
    %v845 = vpack.c.b16 %v785, %v783
    %v846 = vpack.c.b16 %v788, %v786
    %v847 = vpack.c.b16 %v789, %v787
    %v848 = vpack.c.b16 %v792, %v790
    %v849 = vpack.c.b16 %v793, %v791
    %v850 = vpack.c.b16 %v796, %v794
    %v851 = vpack.c.b16 %v797, %v795
    %v852 = vpack.c.b16 %v800, %v798
    %v853 = vpack.c.b16 %v801, %v799
    %v854 = vpack.c.b16 %v804, %v802
    %v855 = vpack.c.b16 %v805, %v803
    %v856 = vpack.c.b16 %v808, %v806
    %v857 = vpack.c.b16 %v809, %v807
    %v858 = vpack.c.b16 %v812, %v810
    %v859 = vpack.c.b16 %v813, %v811
    %v860 = vpack.c.b16 %v816, %v814
    %v861 = vpack.c.b16 %v817, %v815
    %v862 = vpack.c.b16 %v820, %v818
    %v863 = vpack.c.b16 %v821, %v819
    %v864 = vpack.c.b16 %v824, %v822
    %v865 = vpack.c.b16 %v825, %v823
    %v866 = vpack.c.b16 %v828, %v826
    %v867 = vpack.c.b16 %v829, %v827
    %v868 = vpack.c.b16 %v832, %v830
    %v869 = vpack.c.b16 %v833, %v831
    %v870 = vpack.c.b16 %v836, %v834
    %v871 = vpack.c.b16 %v837, %v835
    %v872 = vpack.c.b16 %v840, %v838
    %v873 = vpack.c.b16 %v841, %v839
    %906 = vmatprep.subr.bf16.mxu0 %v843
    %907 = vmatpush1.bf16.msra.mxu0 %v842
    %908 = vmatprep.subr.bf16.mxu0 %v845
    %909 = vmatpush1.bf16.msra.mxu0 %v844
    %910 = vmatprep.subr.bf16.mxu0 %v847
    %911 = vmatpush1.bf16.msra.mxu0 %v846
    %912 = vmatprep.subr.bf16.mxu0 %v849
    %913 = vmatpush1.bf16.msra.mxu0 %v848
    %914 = vmatprep.subr.bf16.mxu0 %v851
    %915 = vmatpush1.bf16.msra.mxu0 %v850
    %916 = vmatprep.subr.bf16.mxu0 %v853
    %917 = vmatpush1.bf16.msra.mxu0 %v852
    %918 = vmatprep.subr.bf16.mxu0 %v855
    %919 = vmatpush1.bf16.msra.mxu0 %v854
    %920 = vmatprep.subr.bf16.mxu0 %v857
    %921 = vmatpush1.bf16.msra.mxu0 %v856
    %922 = vmatprep.subr.bf16.mxu0 %v859
    %923 = vmatpush1.bf16.msra.mxu0 %v858
    %924 = vmatprep.subr.bf16.mxu0 %v861
    %925 = vmatpush1.bf16.msra.mxu0 %v860
    %926 = vmatprep.subr.bf16.mxu0 %v863
    %927 = vmatpush1.bf16.msra.mxu0 %v862
    %928 = vmatprep.subr.bf16.mxu0 %v865
    %929 = vmatpush1.bf16.msra.mxu0 %v864
    %930 = vmatprep.subr.bf16.mxu0 %v867
    %931 = vmatpush1.bf16.msra.mxu0 %v866
    %932 = vmatprep.subr.bf16.mxu0 %v869
    %933 = vmatpush1.bf16.msra.mxu0 %v868
    %934 = vmatprep.subr.bf16.mxu0 %v871
    %935 = vmatpush1.bf16.msra.mxu0 %v870
    %936 = vmatprep.subr.bf16.mxu0 %v873
    %937 = vmatpush1.bf16.msra.mxu0 %v872
    %938 = vmatprep.mubr.bf16.mxu0 %v701
    %939 = vmatmul.mubr.bf16.gmra.mrb[0].mxu0 %v700
    %v940 = vpop.f32.mrb[0].mxu0
    %v941 = vadd.f32 %v739, %v940
    %v942 = vpop.f32.mrb[0].mxu0
    %v943 = vadd.f32 %v743, %v942
    %v944 = vpop.f32.mrb[0].mxu0
    %v945 = vpop.f32.mrb[0].mxu0
    %946 = vdwg.mxu0
    %vm947 = vcmp.gt.f32.partialorder %v941, 0.0
    %vm948 = vcmp.gt.f32.partialorder %v943, 0.0
    %v949 = vmul.f32 %v941, 1.442695
    %v950 = vpow.pop %v949
    %v951 = vmul.f32 %v943, 1.442695
    %v952 = vpow.pop %v951
    %v953 = vsub.f32 %v950, 1.0
    %v954 = vsub.f32 %v952, 1.0
    %v955 = vsel %vm947, %v941, %v953
    %v956 = vsel %vm948, %v943, %v954
    %v957 = vpack.c.bf16 %v955, %v955
    %v958 = vpack.c.bf16 %v956, %v956
    %v959 = vld [vmem:[%s5] sm:$0xf]
    %v960 = vld [vmem:[%s5 + $0x4] sm:$0xf]
    %v961 = vld [vmem:[%s5 + $0x8] sm:$0xf]
    %v962 = vld [vmem:[%s5 + $0xc] sm:$0xf]
    %v963 = vld [vmem:[%s5 + $0x10] sm:$0xf]
    %v964 = vld [vmem:[%s5 + $0x14] sm:$0xf]
    %v965 = vld [vmem:[%s5 + $0x18] sm:$0xf]
    %v966 = vld [vmem:[%s5 + $0x1c] sm:$0xf]
    %v967 = vld [vmem:[%s5 + $0x20] sm:$0xf]
    %v968 = vld [vmem:[%s5 + $0x24] sm:$0xf]
    %v969 = vld [vmem:[%s5 + $0x28] sm:$0xf]
    %v970 = vld [vmem:[%s5 + $0x2c] sm:$0xf]
    %v971 = vld [vmem:[%s5 + $0x30] sm:$0xf]
    %v972 = vld [vmem:[%s5 + $0x34] sm:$0xf]
    %v973 = vld [vmem:[%s5 + $0x38] sm:$0xf]
    %v974 = vld [vmem:[%s5 + $0x3c] sm:$0xf]
    %v975 = vld [vmem:[%s5 + $0x40] sm:$0xf]
    %v976 = vld [vmem:[%s5 + $0x44] sm:$0xf]
    %v977 = vld [vmem:[%s5 + $0x48] sm:$0xf]
    %v978 = vld [vmem:[%s5 + $0x4c] sm:$0xf]
    %v979 = vld [vmem:[%s5 + $0x50] sm:$0xf]
    %v980 = vld [vmem:[%s5 + $0x54] sm:$0xf]
    %v981 = vld [vmem:[%s5 + $0x58] sm:$0xf]
    %v982 = vld [vmem:[%s5 + $0x5c] sm:$0xf]
    %v983 = vld [vmem:[%s5 + $0x60] sm:$0xf]
    %v984 = vld [vmem:[%s5 + $0x64] sm:$0xf]
    %v985 = vld [vmem:[%s5 + $0x68] sm:$0xf]
    %v986 = vld [vmem:[%s5 + $0x6c] sm:$0xf]
    %v987 = vld [vmem:[%s5 + $0x70] sm:$0xf]
    %v988 = vld [vmem:[%s5 + $0x74] sm:$0xf]
    %v989 = vld [vmem:[%s5 + $0x78] sm:$0xf]
    %v990 = vld [vmem:[%s5 + $0x7c] sm:$0xf]
    %v991 = vld [vmem:[%s6] sm:$0x1]
    %v993 = vlaneseq
    %v994 = vshrl.u32 %v993, 7
    %v995 = vsub.s32 0, %v994
    %v996 = vrot.slane %v991, %v995
    %v1030 = vunpack.c.l.b16 %v959
    %v1031 = vunpack.c.l.b16 %v960
    %v1032 = vunpack.c.l.b16 %v961
    %v1033 = vunpack.c.l.b16 %v962
    %v1034 = vunpack.c.l.b16 %v963
    %v1035 = vunpack.c.l.b16 %v964
    %v1036 = vunpack.c.l.b16 %v965
    %v1037 = vunpack.c.l.b16 %v966
    %v1038 = vunpack.c.l.b16 %v967
    %v1039 = vunpack.c.l.b16 %v968
    %v1040 = vunpack.c.l.b16 %v969
    %v1041 = vunpack.c.l.b16 %v970
    %v1042 = vunpack.c.l.b16 %v971
    %v1043 = vunpack.c.l.b16 %v972
    %v1044 = vunpack.c.l.b16 %v973
    %v1045 = vunpack.c.l.b16 %v974
    %v1046 = vunpack.c.l.b16 %v975
    %v1047 = vunpack.c.l.b16 %v976
    %v1048 = vunpack.c.l.b16 %v977
    %v1049 = vunpack.c.l.b16 %v978
    %v1050 = vunpack.c.l.b16 %v979
    %v1051 = vunpack.c.l.b16 %v980
    %v1052 = vunpack.c.l.b16 %v981
    %v1053 = vunpack.c.l.b16 %v982
    %v1054 = vunpack.c.l.b16 %v983
    %v1055 = vunpack.c.l.b16 %v984
    %v1056 = vunpack.c.l.b16 %v985
    %v1057 = vunpack.c.l.b16 %v986
    %v1058 = vunpack.c.l.b16 %v987
    %v1059 = vunpack.c.l.b16 %v988
    %v1060 = vunpack.c.l.b16 %v989
    %v1061 = vunpack.c.l.b16 %v990
    %v1062 = vpack.c.b16 %v1031, %v1030
    %v1063 = vpack.c.b16 %v1033, %v1032
    %v1064 = vpack.c.b16 %v1035, %v1034
    %v1065 = vpack.c.b16 %v1037, %v1036
    %v1066 = vpack.c.b16 %v1039, %v1038
    %v1067 = vpack.c.b16 %v1041, %v1040
    %v1068 = vpack.c.b16 %v1043, %v1042
    %v1069 = vpack.c.b16 %v1045, %v1044
    %v1070 = vpack.c.b16 %v1047, %v1046
    %v1071 = vpack.c.b16 %v1049, %v1048
    %v1072 = vpack.c.b16 %v1051, %v1050
    %v1073 = vpack.c.b16 %v1053, %v1052
    %v1074 = vpack.c.b16 %v1055, %v1054
    %v1075 = vpack.c.b16 %v1057, %v1056
    %v1076 = vpack.c.b16 %v1059, %v1058
    %v1077 = vpack.c.b16 %v1061, %v1060
    %1094 = vmatprep.subr.bf16.mxu0 0
    %1095 = vmatpush1.bf16.msra.mxu0 %v1062
    %1096 = vmatprep.subr.bf16.mxu0 0
    %1097 = vmatpush1.bf16.msra.mxu0 %v1063
    %1098 = vmatprep.subr.bf16.mxu0 0
    %1099 = vmatpush1.bf16.msra.mxu0 %v1064
    %1100 = vmatprep.subr.bf16.mxu0 0
    %1101 = vmatpush1.bf16.msra.mxu0 %v1065
    %1102 = vmatprep.subr.bf16.mxu0 0
    %1103 = vmatpush1.bf16.msra.mxu0 %v1066
    %1104 = vmatprep.subr.bf16.mxu0 0
    %1105 = vmatpush1.bf16.msra.mxu0 %v1067
    %1106 = vmatprep.subr.bf16.mxu0 0
    %1107 = vmatpush1.bf16.msra.mxu0 %v1068
    %1108 = vmatprep.subr.bf16.mxu0 0
    %1109 = vmatpush1.bf16.msra.mxu0 %v1069
    %1110 = vmatprep.subr.bf16.mxu0 0
    %1111 = vmatpush1.bf16.msra.mxu0 %v1070
    %1112 = vmatprep.subr.bf16.mxu0 0
    %1113 = vmatpush1.bf16.msra.mxu0 %v1071
    %1114 = vmatprep.subr.bf16.mxu0 0
    %1115 = vmatpush1.bf16.msra.mxu0 %v1072
    %1116 = vmatprep.subr.bf16.mxu0 0
    %1117 = vmatpush1.bf16.msra.mxu0 %v1073
    %1118 = vmatprep.subr.bf16.mxu0 0
    %1119 = vmatpush1.bf16.msra.mxu0 %v1074
    %1120 = vmatprep.subr.bf16.mxu0 0
    %1121 = vmatpush1.bf16.msra.mxu0 %v1075
    %1122 = vmatprep.subr.bf16.mxu0 0
    %1123 = vmatpush1.bf16.msra.mxu0 %v1076
    %1124 = vmatprep.subr.bf16.mxu0 0
    %1125 = vmatpush1.bf16.msra.mxu0 %v1077
    %1126 = vmatprep.mubr.bf16.mxu0 %v958
    %1127 = vmatmul.mubr.bf16.gmra.mrb[0].mxu0 %v957
    %v1128 = vpop.f32.mrb[0].mxu0
    %v1129 = vadd.f32 %v996, %v1128
    %v1130 = vpop.f32.mrb[0].mxu0
    %v1131 = vpop.f32.mrb[0].mxu0
    %v1132 = vpop.f32.mrb[0].mxu0
    %1133 = vdwg.mxu0
    %vm1134 = vcmask 25600
    %v1135 = vsel %vm1134, %v1129, -inf
    %1136 = vmax.xlane.f32.xlu0 %v1135
    %v1137 = vpop.xlane.xlu0 %1136
    %v1138 = vsub.f32 %v1129, %v1137
    %v1139 = vmul.f32 %v1138, 1.442695
    %v1140 = vpow.pop %v1139
    %v1141 = vsel %vm1134, %v1140, 0.0
    %1142 = vadd.xlane.f32.xlu0 %v1141
    %v1143 = vpop.xlane.xlu0 %1142
    %v1144 = vrcp.pop %v1143
    %v1145 = vmul.f32 %v1140, %v1144
    %v1146 = vld [vmem:[#allocation7] sm:$0xf]
    %v1147 = vld [vmem:[#allocation7 + $0x4] sm:$0xf]
    %v1148 = vld [vmem:[#allocation7 + $0x8] sm:$0xf]
    %v1149 = vld [vmem:[#allocation7 + $0xc] sm:$0xf]
    %v1150 = vld [vmem:[#allocation7 + $0x10] sm:$0xf]
    %v1151 = vld [vmem:[#allocation7 + $0x14] sm:$0xf]
    %v1152 = vld [vmem:[#allocation7 + $0x18] sm:$0xf]
    %v1153 = vld [vmem:[#allocation7 + $0x1c] sm:$0xf]
    %v1154 = vld [vmem:[#allocation7 + $0x20] sm:$0xf]
    %v1155 = vld [vmem:[#allocation7 + $0x24] sm:$0xf]
    %v1156 = vld [vmem:[#allocation7 + $0x28] sm:$0xf]
    %v1157 = vld [vmem:[#allocation7 + $0x2c] sm:$0xf]
    %v1158 = vld [vmem:[#allocation7 + $0x30] sm:$0xf]
    %v1159 = vld [vmem:[#allocation7 + $0x34] sm:$0xf]
    %v1160 = vld [vmem:[#allocation7 + $0x38] sm:$0xf]
    %v1161 = vld [vmem:[#allocation7 + $0x3c] sm:$0xf]
    %v1178 = vunpack.c.l.b16 %v1146
    %v1179 = vunpack.c.l.b16 %v1147
    %v1180 = vunpack.c.l.b16 %v1148
    %v1181 = vunpack.c.l.b16 %v1149
    %v1182 = vunpack.c.l.b16 %v1150
    %v1183 = vunpack.c.l.b16 %v1151
    %v1184 = vunpack.c.l.b16 %v1152
    %v1185 = vunpack.c.l.b16 %v1153
    %v1186 = vunpack.c.l.b16 %v1154
    %v1187 = vunpack.c.l.b16 %v1155
    %v1188 = vunpack.c.l.b16 %v1156
    %v1189 = vunpack.c.l.b16 %v1157
    %v1190 = vunpack.c.l.b16 %v1158
    %v1191 = vunpack.c.l.b16 %v1159
    %v1192 = vunpack.c.l.b16 %v1160
    %v1193 = vunpack.c.l.b16 %v1161
    %v1194 = vpack.c.b16 %v1179, %v1178
    %v1195 = vpack.c.b16 %v1181, %v1180
    %v1196 = vpack.c.b16 %v1183, %v1182
    %v1197 = vpack.c.b16 %v1185, %v1184
    %v1198 = vpack.c.b16 %v1187, %v1186
    %v1199 = vpack.c.b16 %v1189, %v1188
    %v1200 = vpack.c.b16 %v1191, %v1190
    %v1201 = vpack.c.b16 %v1193, %v1192
    %1210 = vmatprep.subr.bf16.mxu0 0
    %1211 = vmatpush1.bf16.msra.mxu0 %v1194
    %1212 = vmatprep.subr.bf16.mxu0 0
    %1213 = vmatpush1.bf16.msra.mxu0 %v1195
    %1214 = vmatprep.subr.bf16.mxu0 0
    %1215 = vmatpush1.bf16.msra.mxu0 %v1196
    %1216 = vmatprep.subr.bf16.mxu0 0
    %1217 = vmatpush1.bf16.msra.mxu0 %v1197
    %1218 = vmatprep.subr.bf16.mxu0 0
    %1219 = vmatpush1.bf16.msra.mxu0 %v1198
    %1220 = vmatprep.subr.bf16.mxu0 0
    %1221 = vmatpush1.bf16.msra.mxu0 %v1199
    %1222 = vmatprep.subr.bf16.mxu0 0
    %1223 = vmatpush1.bf16.msra.mxu0 %v1200
    %1224 = vmatprep.subr.bf16.mxu0 0
    %1225 = vmatpush1.bf16.msra.mxu0 %v1201
    %1226 = vmatprep.subr.bf16.mxu0 0
    %1227 = vmatpush1.bf16.msra.mxu0 0
    %1228 = vmatprep.subr.bf16.mxu0 0
    %1229 = vmatpush1.bf16.msra.mxu0 0
    %1230 = vmatprep.subr.bf16.mxu0 0
    %1231 = vmatpush1.bf16.msra.mxu0 0
    %1232 = vmatprep.subr.bf16.mxu0 0
    %1233 = vmatpush1.bf16.msra.mxu0 0
    %1234 = vmatprep.subr.bf16.mxu0 0
    %1235 = vmatpush1.bf16.msra.mxu0 0
    %1236 = vmatprep.subr.bf16.mxu0 0
    %1237 = vmatpush1.bf16.msra.mxu0 0
    %1238 = vmatprep.subr.bf16.mxu0 0
    %1239 = vmatpush1.bf16.msra.mxu0 0
    %1240 = vmatprep.subr.bf16.mxu0 0
    %1241 = vmatpush1.bf16.msra.mxu0 0
    %1242 = vmatprep.mubr.bf16.mxu0 0
    %1243 = vmatmul.mubr.bf16.gmra.mrb[0].mxu0 %v257
    %v1244 = vpop.f32.mrb[0].mxu0
    %v1245 = vadd.f32 0.0, %v1244
    %v1246 = vpop.f32.mrb[0].mxu0
    %v1247 = vpop.f32.mrb[0].mxu0
    %v1248 = vpop.f32.mrb[0].mxu0
    %1249 = vdwg.mxu0
    %1251 = vset.pattern.permute.xlu0 0
    %1252 = vperm.xlu0 %1251, %v1145
    %v1253 = vpop.permute.xlu0 %1252
    %v1255 = vmul.f32 %v1253, %v1245
    %s1256 = scalar_lea.vmem [#allocation7], 64
    %v1257 = vld [vmem:[%s1256] sm:$0xf]
    %v1258 = vld [vmem:[%s1256 + $0x4] sm:$0xf]
    %v1259 = vld [vmem:[%s1256 + $0x8] sm:$0xf]
    %v1260 = vld [vmem:[%s1256 + $0xc] sm:$0xf]
    %v1261 = vld [vmem:[%s1256 + $0x10] sm:$0xf]
    %v1262 = vld [vmem:[%s1256 + $0x14] sm:$0xf]
    %v1263 = vld [vmem:[%s1256 + $0x18] sm:$0xf]
    %v1264 = vld [vmem:[%s1256 + $0x1c] sm:$0xf]
    %v1265 = vld [vmem:[%s1256 + $0x20] sm:$0xf]
    %v1266 = vld [vmem:[%s1256 + $0x24] sm:$0xf]
    %v1267 = vld [vmem:[%s1256 + $0x28] sm:$0xf]
    %v1268 = vld [vmem:[%s1256 + $0x2c] sm:$0xf]
    %v1269 = vld [vmem:[%s1256 + $0x30] sm:$0xf]
    %v1270 = vld [vmem:[%s1256 + $0x34] sm:$0xf]
    %v1271 = vld [vmem:[%s1256 + $0x38] sm:$0xf]
    %v1272 = vld [vmem:[%s1256 + $0x3c] sm:$0xf]
    %v1289 = vunpack.c.l.b16 %v1257
    %v1290 = vunpack.c.l.b16 %v1258
    %v1291 = vunpack.c.l.b16 %v1259
    %v1292 = vunpack.c.l.b16 %v1260
    %v1293 = vunpack.c.l.b16 %v1261
    %v1294 = vunpack.c.l.b16 %v1262
    %v1295 = vunpack.c.l.b16 %v1263
    %v1296 = vunpack.c.l.b16 %v1264
    %v1297 = vunpack.c.l.b16 %v1265
    %v1298 = vunpack.c.l.b16 %v1266
    %v1299 = vunpack.c.l.b16 %v1267
    %v1300 = vunpack.c.l.b16 %v1268
    %v1301 = vunpack.c.l.b16 %v1269
    %v1302 = vunpack.c.l.b16 %v1270
    %v1303 = vunpack.c.l.b16 %v1271
    %v1304 = vunpack.c.l.b16 %v1272
    %v1305 = vpack.c.b16 %v1290, %v1289
    %v1306 = vpack.c.b16 %v1292, %v1291
    %v1307 = vpack.c.b16 %v1294, %v1293
    %v1308 = vpack.c.b16 %v1296, %v1295
    %v1309 = vpack.c.b16 %v1298, %v1297
    %v1310 = vpack.c.b16 %v1300, %v1299
    %v1311 = vpack.c.b16 %v1302, %v1301
    %v1312 = vpack.c.b16 %v1304, %v1303
    %1321 = vmatprep.subr.bf16.mxu0 0
    %1322 = vmatpush1.bf16.msra.mxu0 %v1305
    %1323 = vmatprep.subr.bf16.mxu0 0
    %1324 = vmatpush1.bf16.msra.mxu0 %v1306
    %1325 = vmatprep.subr.bf16.mxu0 0
    %1326 = vmatpush1.bf16.msra.mxu0 %v1307
    %1327 = vmatprep.subr.bf16.mxu0 0
    %1328 = vmatpush1.bf16.msra.mxu0 %v1308
    %1329 = vmatprep.subr.bf16.mxu0 0
    %1330 = vmatpush1.bf16.msra.mxu0 %v1309
    %1331 = vmatprep.subr.bf16.mxu0 0
    %1332 = vmatpush1.bf16.msra.mxu0 %v1310
    %1333 = vmatprep.subr.bf16.mxu0 0
    %1334 = vmatpush1.bf16.msra.mxu0 %v1311
    %1335 = vmatprep.subr.bf16.mxu0 0
    %1336 = vmatpush1.bf16.msra.mxu0 %v1312
    %1337 = vmatprep.subr.bf16.mxu0 0
    %1338 = vmatpush1.bf16.msra.mxu0 0
    %1339 = vmatprep.subr.bf16.mxu0 0
    %1340 = vmatpush1.bf16.msra.mxu0 0
    %1341 = vmatprep.subr.bf16.mxu0 0
    %1342 = vmatpush1.bf16.msra.mxu0 0
    %1343 = vmatprep.subr.bf16.mxu0 0
    %1344 = vmatpush1.bf16.msra.mxu0 0
    %1345 = vmatprep.subr.bf16.mxu0 0
    %1346 = vmatpush1.bf16.msra.mxu0 0
    %1347 = vmatprep.subr.bf16.mxu0 0
    %1348 = vmatpush1.bf16.msra.mxu0 0
    %1349 = vmatprep.subr.bf16.mxu0 0
    %1350 = vmatpush1.bf16.msra.mxu0 0
    %1351 = vmatprep.subr.bf16.mxu0 0
    %1352 = vmatpush1.bf16.msra.mxu0 0
    %1353 = vmatprep.mubr.bf16.mxu0 0
    %1354 = vmatmul.mubr.bf16.gmra.mrb[0].mxu0 %v257
    %v1355 = vpop.f32.mrb[0].mxu0
    %v1356 = vadd.f32 0.0, %v1355
    %v1357 = vpop.f32.mrb[0].mxu0
    %v1358 = vpop.f32.mrb[0].mxu0
    %v1359 = vpop.f32.mrb[0].mxu0
    %1360 = vdwg.mxu0
    %1361 = vset.pattern.permute.xlu0 1
    %1362 = vperm.xlu0 %1361, %v1145
    %v1363 = vpop.permute.xlu0 %1362
    %v1365 = vmul.f32 %v1363, %v1356
    %v1366 = vadd.f32 %v1255, %v1365
    %s1367 = scalar_lea.vmem [#allocation7], 128
    %v1368 = vld [vmem:[%s1367] sm:$0xf]
    %v1369 = vld [vmem:[%s1367 + $0x4] sm:$0xf]
    %v1370 = vld [vmem:[%s1367 + $0x8] sm:$0xf]
    %v1371 = vld [vmem:[%s1367 + $0xc] sm:$0xf]
    %v1372 = vld [vmem:[%s1367 + $0x10] sm:$0xf]
    %v1373 = vld [vmem:[%s1367 + $0x14] sm:$0xf]
    %v1374 = vld [vmem:[%s1367 + $0x18] sm:$0xf]
    %v1375 = vld [vmem:[%s1367 + $0x1c] sm:$0xf]
    %v1376 = vld [vmem:[%s1367 + $0x20] sm:$0xf]
    %v1377 = vld [vmem:[%s1367 + $0x24] sm:$0xf]
    %v1378 = vld [vmem:[%s1367 + $0x28] sm:$0xf]
    %v1379 = vld [vmem:[%s1367 + $0x2c] sm:$0xf]
    %v1380 = vld [vmem:[%s1367 + $0x30] sm:$0xf]
    %v1381 = vld [vmem:[%s1367 + $0x34] sm:$0xf]
    %v1382 = vld [vmem:[%s1367 + $0x38] sm:$0xf]
    %v1383 = vld [vmem:[%s1367 + $0x3c] sm:$0xf]
    %v1400 = vunpack.c.l.b16 %v1368
    %v1401 = vunpack.c.l.b16 %v1369
    %v1402 = vunpack.c.l.b16 %v1370
    %v1403 = vunpack.c.l.b16 %v1371
    %v1404 = vunpack.c.l.b16 %v1372
    %v1405 = vunpack.c.l.b16 %v1373
    %v1406 = vunpack.c.l.b16 %v1374
    %v1407 = vunpack.c.l.b16 %v1375
    %v1408 = vunpack.c.l.b16 %v1376
    %v1409 = vunpack.c.l.b16 %v1377
    %v1410 = vunpack.c.l.b16 %v1378
    %v1411 = vunpack.c.l.b16 %v1379
    %v1412 = vunpack.c.l.b16 %v1380
    %v1413 = vunpack.c.l.b16 %v1381
    %v1414 = vunpack.c.l.b16 %v1382
    %v1415 = vunpack.c.l.b16 %v1383
    %v1416 = vpack.c.b16 %v1401, %v1400
    %v1417 = vpack.c.b16 %v1403, %v1402
    %v1418 = vpack.c.b16 %v1405, %v1404
    %v1419 = vpack.c.b16 %v1407, %v1406
    %v1420 = vpack.c.b16 %v1409, %v1408
    %v1421 = vpack.c.b16 %v1411, %v1410
    %v1422 = vpack.c.b16 %v1413, %v1412
    %v1423 = vpack.c.b16 %v1415, %v1414
    %1432 = vmatprep.subr.bf16.mxu0 0
    %1433 = vmatpush1.bf16.msra.mxu0 %v1416
    %1434 = vmatprep.subr.bf16.mxu0 0
    %1435 = vmatpush1.bf16.msra.mxu0 %v1417
    %1436 = vmatprep.subr.bf16.mxu0 0
    %1437 = vmatpush1.bf16.msra.mxu0 %v1418
    %1438 = vmatprep.subr.bf16.mxu0 0
    %1439 = vmatpush1.bf16.msra.mxu0 %v1419
    %1440 = vmatprep.subr.bf16.mxu0 0
    %1441 = vmatpush1.bf16.msra.mxu0 %v1420
    %1442 = vmatprep.subr.bf16.mxu0 0
    %1443 = vmatpush1.bf16.msra.mxu0 %v1421
    %1444 = vmatprep.subr.bf16.mxu0 0
    %1445 = vmatpush1.bf16.msra.mxu0 %v1422
    %1446 = vmatprep.subr.bf16.mxu0 0
    %1447 = vmatpush1.bf16.msra.mxu0 %v1423
    %1448 = vmatprep.subr.bf16.mxu0 0
    %1449 = vmatpush1.bf16.msra.mxu0 0
    %1450 = vmatprep.subr.bf16.mxu0 0
    %1451 = vmatpush1.bf16.msra.mxu0 0
    %1452 = vmatprep.subr.bf16.mxu0 0
    %1453 = vmatpush1.bf16.msra.mxu0 0
    %1454 = vmatprep.subr.bf16.mxu0 0
    %1455 = vmatpush1.bf16.msra.mxu0 0
    %1456 = vmatprep.subr.bf16.mxu0 0
    %1457 = vmatpush1.bf16.msra.mxu0 0
    %1458 = vmatprep.subr.bf16.mxu0 0
    %1459 = vmatpush1.bf16.msra.mxu0 0
    %1460 = vmatprep.subr.bf16.mxu0 0
    %1461 = vmatpush1.bf16.msra.mxu0 0
    %1462 = vmatprep.subr.bf16.mxu0 0
    %1463 = vmatpush1.bf16.msra.mxu0 0
    %1464 = vmatprep.mubr.bf16.mxu0 0
    %1465 = vmatmul.mubr.bf16.gmra.mrb[0].mxu0 %v257
    %v1466 = vpop.f32.mrb[0].mxu0
    %v1467 = vadd.f32 0.0, %v1466
    %v1468 = vpop.f32.mrb[0].mxu0
    %v1469 = vpop.f32.mrb[0].mxu0
    %v1470 = vpop.f32.mrb[0].mxu0
    %1471 = vdwg.mxu0
    %1472 = vset.pattern.permute.xlu0 2
    %1473 = vperm.xlu0 %1472, %v1145
    %v1474 = vpop.permute.xlu0 %1473
    %v1476 = vmul.f32 %v1474, %v1467
    %v1477 = vadd.f32 %v1366, %v1476
    %s1478 = scalar_lea.vmem [#allocation7], 192
    %v1479 = vld [vmem:[%s1478] sm:$0xf]
    %v1480 = vld [vmem:[%s1478 + $0x4] sm:$0xf]
    %v1481 = vld [vmem:[%s1478 + $0x8] sm:$0xf]
    %v1482 = vld [vmem:[%s1478 + $0xc] sm:$0xf]
    %v1483 = vld [vmem:[%s1478 + $0x10] sm:$0xf]
    %v1484 = vld [vmem:[%s1478 + $0x14] sm:$0xf]
    %v1485 = vld [vmem:[%s1478 + $0x18] sm:$0xf]
    %v1486 = vld [vmem:[%s1478 + $0x1c] sm:$0xf]
    %v1487 = vld [vmem:[%s1478 + $0x20] sm:$0xf]
    %v1488 = vld [vmem:[%s1478 + $0x24] sm:$0xf]
    %v1489 = vld [vmem:[%s1478 + $0x28] sm:$0xf]
    %v1490 = vld [vmem:[%s1478 + $0x2c] sm:$0xf]
    %v1491 = vld [vmem:[%s1478 + $0x30] sm:$0xf]
    %v1492 = vld [vmem:[%s1478 + $0x34] sm:$0xf]
    %v1493 = vld [vmem:[%s1478 + $0x38] sm:$0xf]
    %v1494 = vld [vmem:[%s1478 + $0x3c] sm:$0xf]
    %v1511 = vunpack.c.l.b16 %v1479
    %v1512 = vunpack.c.l.b16 %v1480
    %v1513 = vunpack.c.l.b16 %v1481
    %v1514 = vunpack.c.l.b16 %v1482
    %v1515 = vunpack.c.l.b16 %v1483
    %v1516 = vunpack.c.l.b16 %v1484
    %v1517 = vunpack.c.l.b16 %v1485
    %v1518 = vunpack.c.l.b16 %v1486
    %v1519 = vunpack.c.l.b16 %v1487
    %v1520 = vunpack.c.l.b16 %v1488
    %v1521 = vunpack.c.l.b16 %v1489
    %v1522 = vunpack.c.l.b16 %v1490
    %v1523 = vunpack.c.l.b16 %v1491
    %v1524 = vunpack.c.l.b16 %v1492
    %v1525 = vunpack.c.l.b16 %v1493
    %v1526 = vunpack.c.l.b16 %v1494
    %v1527 = vpack.c.b16 %v1512, %v1511
    %v1528 = vpack.c.b16 %v1514, %v1513
    %v1529 = vpack.c.b16 %v1516, %v1515
    %v1530 = vpack.c.b16 %v1518, %v1517
    %v1531 = vpack.c.b16 %v1520, %v1519
    %v1532 = vpack.c.b16 %v1522, %v1521
    %v1533 = vpack.c.b16 %v1524, %v1523
    %v1534 = vpack.c.b16 %v1526, %v1525
    %1543 = vmatprep.subr.bf16.mxu0 0
    %1544 = vmatpush1.bf16.msra.mxu0 %v1527
    %1545 = vmatprep.subr.bf16.mxu0 0
    %1546 = vmatpush1.bf16.msra.mxu0 %v1528
    %1547 = vmatprep.subr.bf16.mxu0 0
    %1548 = vmatpush1.bf16.msra.mxu0 %v1529
    %1549 = vmatprep.subr.bf16.mxu0 0
    %1550 = vmatpush1.bf16.msra.mxu0 %v1530
    %1551 = vmatprep.subr.bf16.mxu0 0
    %1552 = vmatpush1.bf16.msra.mxu0 %v1531
    %1553 = vmatprep.subr.bf16.mxu0 0
    %1554 = vmatpush1.bf16.msra.mxu0 %v1532
    %1555 = vmatprep.subr.bf16.mxu0 0
    %1556 = vmatpush1.bf16.msra.mxu0 %v1533
    %1557 = vmatprep.subr.bf16.mxu0 0
    %1558 = vmatpush1.bf16.msra.mxu0 %v1534
    %1559 = vmatprep.subr.bf16.mxu0 0
    %1560 = vmatpush1.bf16.msra.mxu0 0
    %1561 = vmatprep.subr.bf16.mxu0 0
    %1562 = vmatpush1.bf16.msra.mxu0 0
    %1563 = vmatprep.subr.bf16.mxu0 0
    %1564 = vmatpush1.bf16.msra.mxu0 0
    %1565 = vmatprep.subr.bf16.mxu0 0
    %1566 = vmatpush1.bf16.msra.mxu0 0
    %1567 = vmatprep.subr.bf16.mxu0 0
    %1568 = vmatpush1.bf16.msra.mxu0 0
    %1569 = vmatprep.subr.bf16.mxu0 0
    %1570 = vmatpush1.bf16.msra.mxu0 0
    %1571 = vmatprep.subr.bf16.mxu0 0
    %1572 = vmatpush1.bf16.msra.mxu0 0
    %1573 = vmatprep.subr.bf16.mxu0 0
    %1574 = vmatpush1.bf16.msra.mxu0 0
    %1575 = vmatprep.mubr.bf16.mxu0 0
    %1576 = vmatmul.mubr.bf16.gmra.mrb[0].mxu0 %v257
    %v1577 = vpop.f32.mrb[0].mxu0
    %v1578 = vadd.f32 0.0, %v1577
    %v1579 = vpop.f32.mrb[0].mxu0
    %v1580 = vpop.f32.mrb[0].mxu0
    %v1581 = vpop.f32.mrb[0].mxu0
    %1582 = vdwg.mxu0
    %1583 = vset.pattern.permute.xlu0 3
    %1584 = vperm.xlu0 %1583, %v1145
    %v1585 = vpop.permute.xlu0 %1584
    %v1587 = vmul.f32 %v1585, %v1578
    %v1588 = vadd.f32 %v1477, %v1587
    %v1591 = vunpack.c.l.s4 1966171168
    %v1592 = vunpack.c.0.s8 %v1591
    %v1593 = vlaneseq
    %v1594 = vshrl.u32 %v1593, 7
    %v1595 = vsub.s32 %v1592, %v1594
    %v1596 = vrot.slane %v1588, %v1595
    %v1597 = vcombine.high %v1596, %v1596
    %v1599 = vunpack.c.l.s4 1966171168
    %v1600 = vunpack.c.0.s8 %v1599
    %v1601 = vlaneseq
    %v1602 = vshrl.u32 %v1601, 7
    %v1603 = vsub.s32 %v1600, %v1602
    %v1604 = vrot.slane %v1596, %v1603
    %v1606 = vunpack.c.l.s4 1966171168
    %v1607 = vunpack.c.0.s8 %v1606
    %v1608 = vlaneseq
    %v1609 = vshrl.u32 %v1608, 7
    %v1610 = vsub.s32 %v1607, %v1609
    %v1611 = vrot.slane %v1597, %v1610
    %1614 = vst [vmem:[#allocation8] sm:$0x1] %v1604
    %1615 = vst [vmem:[#allocation8 + $0x4] sm:$0x1] %v1611
    %v1616 = vld [vmem:[#allocation7] sm:$0xf]
    %v1617 = vld [vmem:[#allocation7 + $0x4] sm:$0xf]
    %v1618 = vld [vmem:[#allocation7 + $0x8] sm:$0xf]
    %v1619 = vld [vmem:[#allocation7 + $0xc] sm:$0xf]
    %v1620 = vld [vmem:[#allocation7 + $0x10] sm:$0xf]
    %v1621 = vld [vmem:[#allocation7 + $0x14] sm:$0xf]
    %v1622 = vld [vmem:[#allocation7 + $0x18] sm:$0xf]
    %v1623 = vld [vmem:[#allocation7 + $0x1c] sm:$0xf]
    %v1624 = vld [vmem:[#allocation7 + $0x20] sm:$0xf]
    %v1625 = vld [vmem:[#allocation7 + $0x24] sm:$0xf]
    %v1626 = vld [vmem:[#allocation7 + $0x28] sm:$0xf]
    %v1627 = vld [vmem:[#allocation7 + $0x2c] sm:$0xf]
    %v1628 = vld [vmem:[#allocation7 + $0x30] sm:$0xf]
    %v1629 = vld [vmem:[#allocation7 + $0x34] sm:$0xf]
    %v1630 = vld [vmem:[#allocation7 + $0x38] sm:$0xf]
    %v1631 = vld [vmem:[#allocation7 + $0x3c] sm:$0xf]
    %v1648 = vunpack.c.l.b16 %v1616
    %v1649 = vunpack.c.l.b16 %v1617
    %v1650 = vunpack.c.l.b16 %v1618
    %v1651 = vunpack.c.l.b16 %v1619
    %v1652 = vunpack.c.l.b16 %v1620
    %v1653 = vunpack.c.l.b16 %v1621
    %v1654 = vunpack.c.l.b16 %v1622
    %v1655 = vunpack.c.l.b16 %v1623
    %v1656 = vunpack.c.l.b16 %v1624
    %v1657 = vunpack.c.l.b16 %v1625
    %v1658 = vunpack.c.l.b16 %v1626
    %v1659 = vunpack.c.l.b16 %v1627
    %v1660 = vunpack.c.l.b16 %v1628
    %v1661 = vunpack.c.l.b16 %v1629
    %v1662 = vunpack.c.l.b16 %v1630
    %v1663 = vunpack.c.l.b16 %v1631
    %v1664 = vpack.c.b16 %v1649, %v1648
    %v1665 = vpack.c.b16 %v1651, %v1650
    %v1666 = vpack.c.b16 %v1653, %v1652
    %v1667 = vpack.c.b16 %v1655, %v1654
    %v1668 = vpack.c.b16 %v1657, %v1656
    %v1669 = vpack.c.b16 %v1659, %v1658
    %v1670 = vpack.c.b16 %v1661, %v1660
    %v1671 = vpack.c.b16 %v1663, %v1662
    %1680 = vmatprep.subr.bf16.mxu0 0
    %1681 = vmatpush1.bf16.msra.mxu0 %v1664
    %1682 = vmatprep.subr.bf16.mxu0 0
    %1683 = vmatpush1.bf16.msra.mxu0 %v1665
    %1684 = vmatprep.subr.bf16.mxu0 0
    %1685 = vmatpush1.bf16.msra.mxu0 %v1666
    %1686 = vmatprep.subr.bf16.mxu0 0
    %1687 = vmatpush1.bf16.msra.mxu0 %v1667
    %1688 = vmatprep.subr.bf16.mxu0 0
    %1689 = vmatpush1.bf16.msra.mxu0 %v1668
    %1690 = vmatprep.subr.bf16.mxu0 0
    %1691 = vmatpush1.bf16.msra.mxu0 %v1669
    %1692 = vmatprep.subr.bf16.mxu0 0
    %1693 = vmatpush1.bf16.msra.mxu0 %v1670
    %1694 = vmatprep.subr.bf16.mxu0 0
    %1695 = vmatpush1.bf16.msra.mxu0 %v1671
    %1696 = vmatprep.subr.bf16.mxu0 0
    %1697 = vmatpush1.bf16.msra.mxu0 0
    %1698 = vmatprep.subr.bf16.mxu0 0
    %1699 = vmatpush1.bf16.msra.mxu0 0
    %1700 = vmatprep.subr.bf16.mxu0 0
    %1701 = vmatpush1.bf16.msra.mxu0 0
    %1702 = vmatprep.subr.bf16.mxu0 0
    %1703 = vmatpush1.bf16.msra.mxu0 0
    %1704 = vmatprep.subr.bf16.mxu0 0
    %1705 = vmatpush1.bf16.msra.mxu0 0
    %1706 = vmatprep.subr.bf16.mxu0 0
    %1707 = vmatpush1.bf16.msra.mxu0 0
    %1708 = vmatprep.subr.bf16.mxu0 0
    %1709 = vmatpush1.bf16.msra.mxu0 0
    %1710 = vmatprep.subr.bf16.mxu0 0
    %1711 = vmatpush1.bf16.msra.mxu0 0
    %1712 = vmatprep.mubr.bf16.mxu0 0
    %1713 = vmatmul.mubr.bf16.gmra.mrb[0].mxu0 %v128
    %v1714 = vpop.f32.mrb[0].mxu0
    %v1715 = vadd.f32 0.0, %v1714
    %v1716 = vpop.f32.mrb[0].mxu0
    %v1717 = vpop.f32.mrb[0].mxu0
    %v1718 = vpop.f32.mrb[0].mxu0
    %1719 = vdwg.mxu0
    %v1720 = vmul.f32 %v1253, %v1715
    %v1721 = vld [vmem:[%s1256] sm:$0xf]
    %v1722 = vld [vmem:[%s1256 + $0x4] sm:$0xf]
    %v1723 = vld [vmem:[%s1256 + $0x8] sm:$0xf]
    %v1724 = vld [vmem:[%s1256 + $0xc] sm:$0xf]
    %v1725 = vld [vmem:[%s1256 + $0x10] sm:$0xf]
    %v1726 = vld [vmem:[%s1256 + $0x14] sm:$0xf]
    %v1727 = vld [vmem:[%s1256 + $0x18] sm:$0xf]
    %v1728 = vld [vmem:[%s1256 + $0x1c] sm:$0xf]
    %v1729 = vld [vmem:[%s1256 + $0x20] sm:$0xf]
    %v1730 = vld [vmem:[%s1256 + $0x24] sm:$0xf]
    %v1731 = vld [vmem:[%s1256 + $0x28] sm:$0xf]
    %v1732 = vld [vmem:[%s1256 + $0x2c] sm:$0xf]
    %v1733 = vld [vmem:[%s1256 + $0x30] sm:$0xf]
    %v1734 = vld [vmem:[%s1256 + $0x34] sm:$0xf]
    %v1735 = vld [vmem:[%s1256 + $0x38] sm:$0xf]
    %v1736 = vld [vmem:[%s1256 + $0x3c] sm:$0xf]
    %v1753 = vunpack.c.l.b16 %v1721
    %v1754 = vunpack.c.l.b16 %v1722
    %v1755 = vunpack.c.l.b16 %v1723
    %v1756 = vunpack.c.l.b16 %v1724
    %v1757 = vunpack.c.l.b16 %v1725
    %v1758 = vunpack.c.l.b16 %v1726
    %v1759 = vunpack.c.l.b16 %v1727
    %v1760 = vunpack.c.l.b16 %v1728
    %v1761 = vunpack.c.l.b16 %v1729
    %v1762 = vunpack.c.l.b16 %v1730
    %v1763 = vunpack.c.l.b16 %v1731
    %v1764 = vunpack.c.l.b16 %v1732
    %v1765 = vunpack.c.l.b16 %v1733
    %v1766 = vunpack.c.l.b16 %v1734
    %v1767 = vunpack.c.l.b16 %v1735
    %v1768 = vunpack.c.l.b16 %v1736
    %v1769 = vpack.c.b16 %v1754, %v1753
    %v1770 = vpack.c.b16 %v1756, %v1755
    %v1771 = vpack.c.b16 %v1758, %v1757
    %v1772 = vpack.c.b16 %v1760, %v1759
    %v1773 = vpack.c.b16 %v1762, %v1761
    %v1774 = vpack.c.b16 %v1764, %v1763
    %v1775 = vpack.c.b16 %v1766, %v1765
    %v1776 = vpack.c.b16 %v1768, %v1767
    %1785 = vmatprep.subr.bf16.mxu0 0
    %1786 = vmatpush1.bf16.msra.mxu0 %v1769
    %1787 = vmatprep.subr.bf16.mxu0 0
    %1788 = vmatpush1.bf16.msra.mxu0 %v1770
    %1789 = vmatprep.subr.bf16.mxu0 0
    %1790 = vmatpush1.bf16.msra.mxu0 %v1771
    %1791 = vmatprep.subr.bf16.mxu0 0
    %1792 = vmatpush1.bf16.msra.mxu0 %v1772
    %1793 = vmatprep.subr.bf16.mxu0 0
    %1794 = vmatpush1.bf16.msra.mxu0 %v1773
    %1795 = vmatprep.subr.bf16.mxu0 0
    %1796 = vmatpush1.bf16.msra.mxu0 %v1774
    %1797 = vmatprep.subr.bf16.mxu0 0
    %1798 = vmatpush1.bf16.msra.mxu0 %v1775
    %1799 = vmatprep.subr.bf16.mxu0 0
    %1800 = vmatpush1.bf16.msra.mxu0 %v1776
    %1801 = vmatprep.subr.bf16.mxu0 0
    %1802 = vmatpush1.bf16.msra.mxu0 0
    %1803 = vmatprep.subr.bf16.mxu0 0
    %1804 = vmatpush1.bf16.msra.mxu0 0
    %1805 = vmatprep.subr.bf16.mxu0 0
    %1806 = vmatpush1.bf16.msra.mxu0 0
    %1807 = vmatprep.subr.bf16.mxu0 0
    %1808 = vmatpush1.bf16.msra.mxu0 0
    %1809 = vmatprep.subr.bf16.mxu0 0
    %1810 = vmatpush1.bf16.msra.mxu0 0
    %1811 = vmatprep.subr.bf16.mxu0 0
    %1812 = vmatpush1.bf16.msra.mxu0 0
    %1813 = vmatprep.subr.bf16.mxu0 0
    %1814 = vmatpush1.bf16.msra.mxu0 0
    %1815 = vmatprep.subr.bf16.mxu0 0
    %1816 = vmatpush1.bf16.msra.mxu0 0
    %1817 = vmatprep.mubr.bf16.mxu0 0
    %1818 = vmatmul.mubr.bf16.gmra.mrb[0].mxu0 %v128
    %v1819 = vpop.f32.mrb[0].mxu0
    %v1820 = vadd.f32 0.0, %v1819
    %v1821 = vpop.f32.mrb[0].mxu0
    %v1822 = vpop.f32.mrb[0].mxu0
    %v1823 = vpop.f32.mrb[0].mxu0
    %1824 = vdwg.mxu0
    %v1825 = vmul.f32 %v1363, %v1820
    %v1826 = vadd.f32 %v1720, %v1825
    %v1827 = vld [vmem:[%s1367] sm:$0xf]
    %v1828 = vld [vmem:[%s1367 + $0x4] sm:$0xf]
    %v1829 = vld [vmem:[%s1367 + $0x8] sm:$0xf]
    %v1830 = vld [vmem:[%s1367 + $0xc] sm:$0xf]
    %v1831 = vld [vmem:[%s1367 + $0x10] sm:$0xf]
    %v1832 = vld [vmem:[%s1367 + $0x14] sm:$0xf]
    %v1833 = vld [vmem:[%s1367 + $0x18] sm:$0xf]
    %v1834 = vld [vmem:[%s1367 + $0x1c] sm:$0xf]
    %v1835 = vld [vmem:[%s1367 + $0x20] sm:$0xf]
    %v1836 = vld [vmem:[%s1367 + $0x24] sm:$0xf]
    %v1837 = vld [vmem:[%s1367 + $0x28] sm:$0xf]
    %v1838 = vld [vmem:[%s1367 + $0x2c] sm:$0xf]
    %v1839 = vld [vmem:[%s1367 + $0x30] sm:$0xf]
    %v1840 = vld [vmem:[%s1367 + $0x34] sm:$0xf]
    %v1841 = vld [vmem:[%s1367 + $0x38] sm:$0xf]
    %v1842 = vld [vmem:[%s1367 + $0x3c] sm:$0xf]
    %v1859 = vunpack.c.l.b16 %v1827
    %v1860 = vunpack.c.l.b16 %v1828
    %v1861 = vunpack.c.l.b16 %v1829
    %v1862 = vunpack.c.l.b16 %v1830
    %v1863 = vunpack.c.l.b16 %v1831
    %v1864 = vunpack.c.l.b16 %v1832
    %v1865 = vunpack.c.l.b16 %v1833
    %v1866 = vunpack.c.l.b16 %v1834
    %v1867 = vunpack.c.l.b16 %v1835
    %v1868 = vunpack.c.l.b16 %v1836
    %v1869 = vunpack.c.l.b16 %v1837
    %v1870 = vunpack.c.l.b16 %v1838
    %v1871 = vunpack.c.l.b16 %v1839
    %v1872 = vunpack.c.l.b16 %v1840
    %v1873 = vunpack.c.l.b16 %v1841
    %v1874 = vunpack.c.l.b16 %v1842
    %v1875 = vpack.c.b16 %v1860, %v1859
    %v1876 = vpack.c.b16 %v1862, %v1861
    %v1877 = vpack.c.b16 %v1864, %v1863
    %v1878 = vpack.c.b16 %v1866, %v1865
    %v1879 = vpack.c.b16 %v1868, %v1867
    %v1880 = vpack.c.b16 %v1870, %v1869
    %v1881 = vpack.c.b16 %v1872, %v1871
    %v1882 = vpack.c.b16 %v1874, %v1873
    %1891 = vmatprep.subr.bf16.mxu0 0
    %1892 = vmatpush1.bf16.msra.mxu0 %v1875
    %1893 = vmatprep.subr.bf16.mxu0 0
    %1894 = vmatpush1.bf16.msra.mxu0 %v1876
    %1895 = vmatprep.subr.bf16.mxu0 0
    %1896 = vmatpush1.bf16.msra.mxu0 %v1877
    %1897 = vmatprep.subr.bf16.mxu0 0
    %1898 = vmatpush1.bf16.msra.mxu0 %v1878
    %1899 = vmatprep.subr.bf16.mxu0 0
    %1900 = vmatpush1.bf16.msra.mxu0 %v1879
    %1901 = vmatprep.subr.bf16.mxu0 0
    %1902 = vmatpush1.bf16.msra.mxu0 %v1880
    %1903 = vmatprep.subr.bf16.mxu0 0
    %1904 = vmatpush1.bf16.msra.mxu0 %v1881
    %1905 = vmatprep.subr.bf16.mxu0 0
    %1906 = vmatpush1.bf16.msra.mxu0 %v1882
    %1907 = vmatprep.subr.bf16.mxu0 0
    %1908 = vmatpush1.bf16.msra.mxu0 0
    %1909 = vmatprep.subr.bf16.mxu0 0
    %1910 = vmatpush1.bf16.msra.mxu0 0
    %1911 = vmatprep.subr.bf16.mxu0 0
    %1912 = vmatpush1.bf16.msra.mxu0 0
    %1913 = vmatprep.subr.bf16.mxu0 0
    %1914 = vmatpush1.bf16.msra.mxu0 0
    %1915 = vmatprep.subr.bf16.mxu0 0
    %1916 = vmatpush1.bf16.msra.mxu0 0
    %1917 = vmatprep.subr.bf16.mxu0 0
    %1918 = vmatpush1.bf16.msra.mxu0 0
    %1919 = vmatprep.subr.bf16.mxu0 0
    %1920 = vmatpush1.bf16.msra.mxu0 0
    %1921 = vmatprep.subr.bf16.mxu0 0
    %1922 = vmatpush1.bf16.msra.mxu0 0
    %1923 = vmatprep.mubr.bf16.mxu0 0
    %1924 = vmatmul.mubr.bf16.gmra.mrb[0].mxu0 %v128
    %v1925 = vpop.f32.mrb[0].mxu0
    %v1926 = vadd.f32 0.0, %v1925
    %v1927 = vpop.f32.mrb[0].mxu0
    %v1928 = vpop.f32.mrb[0].mxu0
    %v1929 = vpop.f32.mrb[0].mxu0
    %1930 = vdwg.mxu0
    %v1931 = vmul.f32 %v1474, %v1926
    %v1932 = vadd.f32 %v1826, %v1931
    %v1933 = vld [vmem:[%s1478] sm:$0xf]
    %v1934 = vld [vmem:[%s1478 + $0x4] sm:$0xf]
    %v1935 = vld [vmem:[%s1478 + $0x8] sm:$0xf]
    %v1936 = vld [vmem:[%s1478 + $0xc] sm:$0xf]
    %v1937 = vld [vmem:[%s1478 + $0x10] sm:$0xf]
    %v1938 = vld [vmem:[%s1478 + $0x14] sm:$0xf]
    %v1939 = vld [vmem:[%s1478 + $0x18] sm:$0xf]
    %v1940 = vld [vmem:[%s1478 + $0x1c] sm:$0xf]
    %v1941 = vld [vmem:[%s1478 + $0x20] sm:$0xf]
    %v1942 = vld [vmem:[%s1478 + $0x24] sm:$0xf]
    %v1943 = vld [vmem:[%s1478 + $0x28] sm:$0xf]
    %v1944 = vld [vmem:[%s1478 + $0x2c] sm:$0xf]
    %v1945 = vld [vmem:[%s1478 + $0x30] sm:$0xf]
    %v1946 = vld [vmem:[%s1478 + $0x34] sm:$0xf]
    %v1947 = vld [vmem:[%s1478 + $0x38] sm:$0xf]
    %v1948 = vld [vmem:[%s1478 + $0x3c] sm:$0xf]
    %v1965 = vunpack.c.l.b16 %v1933
    %v1966 = vunpack.c.l.b16 %v1934
    %v1967 = vunpack.c.l.b16 %v1935
    %v1968 = vunpack.c.l.b16 %v1936
    %v1969 = vunpack.c.l.b16 %v1937
    %v1970 = vunpack.c.l.b16 %v1938
    %v1971 = vunpack.c.l.b16 %v1939
    %v1972 = vunpack.c.l.b16 %v1940
    %v1973 = vunpack.c.l.b16 %v1941
    %v1974 = vunpack.c.l.b16 %v1942
    %v1975 = vunpack.c.l.b16 %v1943
    %v1976 = vunpack.c.l.b16 %v1944
    %v1977 = vunpack.c.l.b16 %v1945
    %v1978 = vunpack.c.l.b16 %v1946
    %v1979 = vunpack.c.l.b16 %v1947
    %v1980 = vunpack.c.l.b16 %v1948
    %v1981 = vpack.c.b16 %v1966, %v1965
    %v1982 = vpack.c.b16 %v1968, %v1967
    %v1983 = vpack.c.b16 %v1970, %v1969
    %v1984 = vpack.c.b16 %v1972, %v1971
    %v1985 = vpack.c.b16 %v1974, %v1973
    %v1986 = vpack.c.b16 %v1976, %v1975
    %v1987 = vpack.c.b16 %v1978, %v1977
    %v1988 = vpack.c.b16 %v1980, %v1979
    %1997 = vmatprep.subr.bf16.mxu0 0
    %1998 = vmatpush1.bf16.msra.mxu0 %v1981
    %1999 = vmatprep.subr.bf16.mxu0 0
    %2000 = vmatpush1.bf16.msra.mxu0 %v1982
    %2001 = vmatprep.subr.bf16.mxu0 0
    %2002 = vmatpush1.bf16.msra.mxu0 %v1983
    %2003 = vmatprep.subr.bf16.mxu0 0
    %2004 = vmatpush1.bf16.msra.mxu0 %v1984
    %2005 = vmatprep.subr.bf16.mxu0 0
    %2006 = vmatpush1.bf16.msra.mxu0 %v1985
    %2007 = vmatprep.subr.bf16.mxu0 0
    %2008 = vmatpush1.bf16.msra.mxu0 %v1986
    %2009 = vmatprep.subr.bf16.mxu0 0
    %2010 = vmatpush1.bf16.msra.mxu0 %v1987
    %2011 = vmatprep.subr.bf16.mxu0 0
    %2012 = vmatpush1.bf16.msra.mxu0 %v1988
    %2013 = vmatprep.subr.bf16.mxu0 0
    %2014 = vmatpush1.bf16.msra.mxu0 0
    %2015 = vmatprep.subr.bf16.mxu0 0
    %2016 = vmatpush1.bf16.msra.mxu0 0
    %2017 = vmatprep.subr.bf16.mxu0 0
    %2018 = vmatpush1.bf16.msra.mxu0 0
    %2019 = vmatprep.subr.bf16.mxu0 0
    %2020 = vmatpush1.bf16.msra.mxu0 0
    %2021 = vmatprep.subr.bf16.mxu0 0
    %2022 = vmatpush1.bf16.msra.mxu0 0
    %2023 = vmatprep.subr.bf16.mxu0 0
    %2024 = vmatpush1.bf16.msra.mxu0 0
    %2025 = vmatprep.subr.bf16.mxu0 0
    %2026 = vmatpush1.bf16.msra.mxu0 0
    %2027 = vmatprep.subr.bf16.mxu0 0
    %2028 = vmatpush1.bf16.msra.mxu0 0
    %2029 = vmatprep.mubr.bf16.mxu0 0
    %2030 = vmatmul.mubr.bf16.gmra.mrb[0].mxu0 %v128
    %v2031 = vpop.f32.mrb[0].mxu0
    %v2032 = vadd.f32 0.0, %v2031
    %v2033 = vpop.f32.mrb[0].mxu0
    %v2034 = vpop.f32.mrb[0].mxu0
    %v2035 = vpop.f32.mrb[0].mxu0
    %2036 = vdwg.mxu0
    %v2037 = vmul.f32 %v1585, %v2032
    %v2038 = vadd.f32 %v1932, %v2037
    %v2041 = vunpack.c.l.s4 1966171168
    %v2042 = vunpack.c.0.s8 %v2041
    %v2043 = vlaneseq
    %v2044 = vshrl.u32 %v2043, 7
    %v2045 = vsub.s32 %v2042, %v2044
    %v2046 = vrot.slane %v2038, %v2045
    %v2047 = vcombine.high %v2046, %v2046
    %v2049 = vunpack.c.l.s4 1966171168
    %v2050 = vunpack.c.0.s8 %v2049
    %v2051 = vlaneseq
    %v2052 = vshrl.u32 %v2051, 7
    %v2053 = vsub.s32 %v2050, %v2052
    %v2054 = vrot.slane %v2046, %v2053
    %v2056 = vunpack.c.l.s4 1966171168
    %v2057 = vunpack.c.0.s8 %v2056
    %v2058 = vlaneseq
    %v2059 = vshrl.u32 %v2058, 7
    %v2060 = vsub.s32 %v2057, %v2059
    %v2061 = vrot.slane %v2047, %v2060
    %2064 = vst [vmem:[#allocation8 + $0x1] sm:$0x1] %v2054
    %2065 = vst [vmem:[#allocation8 + $0x5] sm:$0x1] %v2061
    %v2066 = vld [vmem:[#allocation7] sm:$0xf]
    %v2067 = vld [vmem:[#allocation7 + $0x4] sm:$0xf]
    %v2068 = vld [vmem:[#allocation7 + $0x8] sm:$0xf]
    %v2069 = vld [vmem:[#allocation7 + $0xc] sm:$0xf]
    %v2070 = vld [vmem:[#allocation7 + $0x10] sm:$0xf]
    %v2071 = vld [vmem:[#allocation7 + $0x14] sm:$0xf]
    %v2072 = vld [vmem:[#allocation7 + $0x18] sm:$0xf]
    %v2073 = vld [vmem:[#allocation7 + $0x1c] sm:$0xf]
    %v2074 = vld [vmem:[#allocation7 + $0x20] sm:$0xf]
    %v2075 = vld [vmem:[#allocation7 + $0x24] sm:$0xf]
    %v2076 = vld [vmem:[#allocation7 + $0x28] sm:$0xf]
    %v2077 = vld [vmem:[#allocation7 + $0x2c] sm:$0xf]
    %v2078 = vld [vmem:[#allocation7 + $0x30] sm:$0xf]
    %v2079 = vld [vmem:[#allocation7 + $0x34] sm:$0xf]
    %v2080 = vld [vmem:[#allocation7 + $0x38] sm:$0xf]
    %v2081 = vld [vmem:[#allocation7 + $0x3c] sm:$0xf]
    %v2098 = vunpack.c.l.b16 %v2066
    %v2099 = vunpack.c.l.b16 %v2067
    %v2100 = vunpack.c.l.b16 %v2068
    %v2101 = vunpack.c.l.b16 %v2069
    %v2102 = vunpack.c.l.b16 %v2070
    %v2103 = vunpack.c.l.b16 %v2071
    %v2104 = vunpack.c.l.b16 %v2072
    %v2105 = vunpack.c.l.b16 %v2073
    %v2106 = vunpack.c.l.b16 %v2074
    %v2107 = vunpack.c.l.b16 %v2075
    %v2108 = vunpack.c.l.b16 %v2076
    %v2109 = vunpack.c.l.b16 %v2077
    %v2110 = vunpack.c.l.b16 %v2078
    %v2111 = vunpack.c.l.b16 %v2079
    %v2112 = vunpack.c.l.b16 %v2080
    %v2113 = vunpack.c.l.b16 %v2081
    %v2114 = vpack.c.b16 %v2099, %v2098
    %v2115 = vpack.c.b16 %v2101, %v2100
    %v2116 = vpack.c.b16 %v2103, %v2102
    %v2117 = vpack.c.b16 %v2105, %v2104
    %v2118 = vpack.c.b16 %v2107, %v2106
    %v2119 = vpack.c.b16 %v2109, %v2108
    %v2120 = vpack.c.b16 %v2111, %v2110
    %v2121 = vpack.c.b16 %v2113, %v2112
    %2130 = vmatprep.subr.bf16.mxu0 0
    %2131 = vmatpush1.bf16.msra.mxu0 %v2114
    %2132 = vmatprep.subr.bf16.mxu0 0
    %2133 = vmatpush1.bf16.msra.mxu0 %v2115
    %2134 = vmatprep.subr.bf16.mxu0 0
    %2135 = vmatpush1.bf16.msra.mxu0 %v2116
    %2136 = vmatprep.subr.bf16.mxu0 0
    %2137 = vmatpush1.bf16.msra.mxu0 %v2117
    %2138 = vmatprep.subr.bf16.mxu0 0
    %2139 = vmatpush1.bf16.msra.mxu0 %v2118
    %2140 = vmatprep.subr.bf16.mxu0 0
    %2141 = vmatpush1.bf16.msra.mxu0 %v2119
    %2142 = vmatprep.subr.bf16.mxu0 0
    %2143 = vmatpush1.bf16.msra.mxu0 %v2120
    %2144 = vmatprep.subr.bf16.mxu0 0
    %2145 = vmatpush1.bf16.msra.mxu0 %v2121
    %2146 = vmatprep.subr.bf16.mxu0 0
    %2147 = vmatpush1.bf16.msra.mxu0 0
    %2148 = vmatprep.subr.bf16.mxu0 0
    %2149 = vmatpush1.bf16.msra.mxu0 0
    %2150 = vmatprep.subr.bf16.mxu0 0
    %2151 = vmatpush1.bf16.msra.mxu0 0
    %2152 = vmatprep.subr.bf16.mxu0 0
    %2153 = vmatpush1.bf16.msra.mxu0 0
    %2154 = vmatprep.subr.bf16.mxu0 0
    %2155 = vmatpush1.bf16.msra.mxu0 0
    %2156 = vmatprep.subr.bf16.mxu0 0
    %2157 = vmatpush1.bf16.msra.mxu0 0
    %2158 = vmatprep.subr.bf16.mxu0 0
    %2159 = vmatpush1.bf16.msra.mxu0 0
    %2160 = vmatprep.subr.bf16.mxu0 0
    %2161 = vmatpush1.bf16.msra.mxu0 0
    %2162 = vmatprep.mubr.bf16.mxu0 0
    %2163 = vmatmul.mubr.bf16.gmra.mrb[0].mxu0 %v403
    %v2164 = vpop.f32.mrb[0].mxu0
    %v2165 = vadd.f32 0.0, %v2164
    %v2166 = vpop.f32.mrb[0].mxu0
    %v2167 = vpop.f32.mrb[0].mxu0
    %v2168 = vpop.f32.mrb[0].mxu0
    %2169 = vdwg.mxu0
    %v2170 = vmul.f32 %v1253, %v2165
    %v2171 = vld [vmem:[%s1256] sm:$0xf]
    %v2172 = vld [vmem:[%s1256 + $0x4] sm:$0xf]
    %v2173 = vld [vmem:[%s1256 + $0x8] sm:$0xf]
    %v2174 = vld [vmem:[%s1256 + $0xc] sm:$0xf]
    %v2175 = vld [vmem:[%s1256 + $0x10] sm:$0xf]
    %v2176 = vld [vmem:[%s1256 + $0x14] sm:$0xf]
    %v2177 = vld [vmem:[%s1256 + $0x18] sm:$0xf]
    %v2178 = vld [vmem:[%s1256 + $0x1c] sm:$0xf]
    %v2179 = vld [vmem:[%s1256 + $0x20] sm:$0xf]
    %v2180 = vld [vmem:[%s1256 + $0x24] sm:$0xf]
    %v2181 = vld [vmem:[%s1256 + $0x28] sm:$0xf]
    %v2182 = vld [vmem:[%s1256 + $0x2c] sm:$0xf]
    %v2183 = vld [vmem:[%s1256 + $0x30] sm:$0xf]
    %v2184 = vld [vmem:[%s1256 + $0x34] sm:$0xf]
    %v2185 = vld [vmem:[%s1256 + $0x38] sm:$0xf]
    %v2186 = vld [vmem:[%s1256 + $0x3c] sm:$0xf]
    %v2203 = vunpack.c.l.b16 %v2171
    %v2204 = vunpack.c.l.b16 %v2172
    %v2205 = vunpack.c.l.b16 %v2173
    %v2206 = vunpack.c.l.b16 %v2174
    %v2207 = vunpack.c.l.b16 %v2175
    %v2208 = vunpack.c.l.b16 %v2176
    %v2209 = vunpack.c.l.b16 %v2177
    %v2210 = vunpack.c.l.b16 %v2178
    %v2211 = vunpack.c.l.b16 %v2179
    %v2212 = vunpack.c.l.b16 %v2180
    %v2213 = vunpack.c.l.b16 %v2181
    %v2214 = vunpack.c.l.b16 %v2182
    %v2215 = vunpack.c.l.b16 %v2183
    %v2216 = vunpack.c.l.b16 %v2184
    %v2217 = vunpack.c.l.b16 %v2185
    %v2218 = vunpack.c.l.b16 %v2186
    %v2219 = vpack.c.b16 %v2204, %v2203
    %v2220 = vpack.c.b16 %v2206, %v2205
    %v2221 = vpack.c.b16 %v2208, %v2207
    %v2222 = vpack.c.b16 %v2210, %v2209
    %v2223 = vpack.c.b16 %v2212, %v2211
    %v2224 = vpack.c.b16 %v2214, %v2213
    %v2225 = vpack.c.b16 %v2216, %v2215
    %v2226 = vpack.c.b16 %v2218, %v2217
    %2235 = vmatprep.subr.bf16.mxu0 0
    %2236 = vmatpush1.bf16.msra.mxu0 %v2219
    %2237 = vmatprep.subr.bf16.mxu0 0
    %2238 = vmatpush1.bf16.msra.mxu0 %v2220
    %2239 = vmatprep.subr.bf16.mxu0 0
    %2240 = vmatpush1.bf16.msra.mxu0 %v2221
    %2241 = vmatprep.subr.bf16.mxu0 0
    %2242 = vmatpush1.bf16.msra.mxu0 %v2222
    %2243 = vmatprep.subr.bf16.mxu0 0
    %2244 = vmatpush1.bf16.msra.mxu0 %v2223
    %2245 = vmatprep.subr.bf16.mxu0 0
    %2246 = vmatpush1.bf16.msra.mxu0 %v2224
    %2247 = vmatprep.subr.bf16.mxu0 0
    %2248 = vmatpush1.bf16.msra.mxu0 %v2225
    %2249 = vmatprep.subr.bf16.mxu0 0
    %2250 = vmatpush1.bf16.msra.mxu0 %v2226
    %2251 = vmatprep.subr.bf16.mxu0 0
    %2252 = vmatpush1.bf16.msra.mxu0 0
    %2253 = vmatprep.subr.bf16.mxu0 0
    %2254 = vmatpush1.bf16.msra.mxu0 0
    %2255 = vmatprep.subr.bf16.mxu0 0
    %2256 = vmatpush1.bf16.msra.mxu0 0
    %2257 = vmatprep.subr.bf16.mxu0 0
    %2258 = vmatpush1.bf16.msra.mxu0 0
    %2259 = vmatprep.subr.bf16.mxu0 0
    %2260 = vmatpush1.bf16.msra.mxu0 0
    %2261 = vmatprep.subr.bf16.mxu0 0
    %2262 = vmatpush1.bf16.msra.mxu0 0
    %2263 = vmatprep.subr.bf16.mxu0 0
    %2264 = vmatpush1.bf16.msra.mxu0 0
    %2265 = vmatprep.subr.bf16.mxu0 0
    %2266 = vmatpush1.bf16.msra.mxu0 0
    %2267 = vmatprep.mubr.bf16.mxu0 0
    %2268 = vmatmul.mubr.bf16.gmra.mrb[0].mxu0 %v403
    %v2269 = vpop.f32.mrb[0].mxu0
    %v2270 = vadd.f32 0.0, %v2269
    %v2271 = vpop.f32.mrb[0].mxu0
    %v2272 = vpop.f32.mrb[0].mxu0
    %v2273 = vpop.f32.mrb[0].mxu0
    %2274 = vdwg.mxu0
    %v2275 = vmul.f32 %v1363, %v2270
    %v2276 = vadd.f32 %v2170, %v2275
    %v2277 = vld [vmem:[%s1367] sm:$0xf]
    %v2278 = vld [vmem:[%s1367 + $0x4] sm:$0xf]
    %v2279 = vld [vmem:[%s1367 + $0x8] sm:$0xf]
    %v2280 = vld [vmem:[%s1367 + $0xc] sm:$0xf]
    %v2281 = vld [vmem:[%s1367 + $0x10] sm:$0xf]
    %v2282 = vld [vmem:[%s1367 + $0x14] sm:$0xf]
    %v2283 = vld [vmem:[%s1367 + $0x18] sm:$0xf]
    %v2284 = vld [vmem:[%s1367 + $0x1c] sm:$0xf]
    %v2285 = vld [vmem:[%s1367 + $0x20] sm:$0xf]
    %v2286 = vld [vmem:[%s1367 + $0x24] sm:$0xf]
    %v2287 = vld [vmem:[%s1367 + $0x28] sm:$0xf]
    %v2288 = vld [vmem:[%s1367 + $0x2c] sm:$0xf]
    %v2289 = vld [vmem:[%s1367 + $0x30] sm:$0xf]
    %v2290 = vld [vmem:[%s1367 + $0x34] sm:$0xf]
    %v2291 = vld [vmem:[%s1367 + $0x38] sm:$0xf]
    %v2292 = vld [vmem:[%s1367 + $0x3c] sm:$0xf]
    %v2309 = vunpack.c.l.b16 %v2277
    %v2310 = vunpack.c.l.b16 %v2278
    %v2311 = vunpack.c.l.b16 %v2279
    %v2312 = vunpack.c.l.b16 %v2280
    %v2313 = vunpack.c.l.b16 %v2281
    %v2314 = vunpack.c.l.b16 %v2282
    %v2315 = vunpack.c.l.b16 %v2283
    %v2316 = vunpack.c.l.b16 %v2284
    %v2317 = vunpack.c.l.b16 %v2285
    %v2318 = vunpack.c.l.b16 %v2286
    %v2319 = vunpack.c.l.b16 %v2287
    %v2320 = vunpack.c.l.b16 %v2288
    %v2321 = vunpack.c.l.b16 %v2289
    %v2322 = vunpack.c.l.b16 %v2290
    %v2323 = vunpack.c.l.b16 %v2291
    %v2324 = vunpack.c.l.b16 %v2292
    %v2325 = vpack.c.b16 %v2310, %v2309
    %v2326 = vpack.c.b16 %v2312, %v2311
    %v2327 = vpack.c.b16 %v2314, %v2313
    %v2328 = vpack.c.b16 %v2316, %v2315
    %v2329 = vpack.c.b16 %v2318, %v2317
    %v2330 = vpack.c.b16 %v2320, %v2319
    %v2331 = vpack.c.b16 %v2322, %v2321
    %v2332 = vpack.c.b16 %v2324, %v2323
    %2341 = vmatprep.subr.bf16.mxu0 0
    %2342 = vmatpush1.bf16.msra.mxu0 %v2325
    %2343 = vmatprep.subr.bf16.mxu0 0
    %2344 = vmatpush1.bf16.msra.mxu0 %v2326
    %2345 = vmatprep.subr.bf16.mxu0 0
    %2346 = vmatpush1.bf16.msra.mxu0 %v2327
    %2347 = vmatprep.subr.bf16.mxu0 0
    %2348 = vmatpush1.bf16.msra.mxu0 %v2328
    %2349 = vmatprep.subr.bf16.mxu0 0
    %2350 = vmatpush1.bf16.msra.mxu0 %v2329
    %2351 = vmatprep.subr.bf16.mxu0 0
    %2352 = vmatpush1.bf16.msra.mxu0 %v2330
    %2353 = vmatprep.subr.bf16.mxu0 0
    %2354 = vmatpush1.bf16.msra.mxu0 %v2331
    %2355 = vmatprep.subr.bf16.mxu0 0
    %2356 = vmatpush1.bf16.msra.mxu0 %v2332
    %2357 = vmatprep.subr.bf16.mxu0 0
    %2358 = vmatpush1.bf16.msra.mxu0 0
    %2359 = vmatprep.subr.bf16.mxu0 0
    %2360 = vmatpush1.bf16.msra.mxu0 0
    %2361 = vmatprep.subr.bf16.mxu0 0
    %2362 = vmatpush1.bf16.msra.mxu0 0
    %2363 = vmatprep.subr.bf16.mxu0 0
    %2364 = vmatpush1.bf16.msra.mxu0 0
    %2365 = vmatprep.subr.bf16.mxu0 0
    %2366 = vmatpush1.bf16.msra.mxu0 0
    %2367 = vmatprep.subr.bf16.mxu0 0
    %2368 = vmatpush1.bf16.msra.mxu0 0
    %2369 = vmatprep.subr.bf16.mxu0 0
    %2370 = vmatpush1.bf16.msra.mxu0 0
    %2371 = vmatprep.subr.bf16.mxu0 0
    %2372 = vmatpush1.bf16.msra.mxu0 0
    %2373 = vmatprep.mubr.bf16.mxu0 0
    %2374 = vmatmul.mubr.bf16.gmra.mrb[0].mxu0 %v403
    %v2375 = vpop.f32.mrb[0].mxu0
    %v2376 = vadd.f32 0.0, %v2375
    %v2377 = vpop.f32.mrb[0].mxu0
    %v2378 = vpop.f32.mrb[0].mxu0
    %v2379 = vpop.f32.mrb[0].mxu0
    %2380 = vdwg.mxu0
    %v2381 = vmul.f32 %v1474, %v2376
    %v2382 = vadd.f32 %v2276, %v2381
    %v2383 = vld [vmem:[%s1478] sm:$0xf]
    %v2384 = vld [vmem:[%s1478 + $0x4] sm:$0xf]
    %v2385 = vld [vmem:[%s1478 + $0x8] sm:$0xf]
    %v2386 = vld [vmem:[%s1478 + $0xc] sm:$0xf]
    %v2387 = vld [vmem:[%s1478 + $0x10] sm:$0xf]
    %v2388 = vld [vmem:[%s1478 + $0x14] sm:$0xf]
    %v2389 = vld [vmem:[%s1478 + $0x18] sm:$0xf]
    %v2390 = vld [vmem:[%s1478 + $0x1c] sm:$0xf]
    %v2391 = vld [vmem:[%s1478 + $0x20] sm:$0xf]
    %v2392 = vld [vmem:[%s1478 + $0x24] sm:$0xf]
    %v2393 = vld [vmem:[%s1478 + $0x28] sm:$0xf]
    %v2394 = vld [vmem:[%s1478 + $0x2c] sm:$0xf]
    %v2395 = vld [vmem:[%s1478 + $0x30] sm:$0xf]
    %v2396 = vld [vmem:[%s1478 + $0x34] sm:$0xf]
    %v2397 = vld [vmem:[%s1478 + $0x38] sm:$0xf]
    %v2398 = vld [vmem:[%s1478 + $0x3c] sm:$0xf]
    %v2415 = vunpack.c.l.b16 %v2383
    %v2416 = vunpack.c.l.b16 %v2384
    %v2417 = vunpack.c.l.b16 %v2385
    %v2418 = vunpack.c.l.b16 %v2386
    %v2419 = vunpack.c.l.b16 %v2387
    %v2420 = vunpack.c.l.b16 %v2388
    %v2421 = vunpack.c.l.b16 %v2389
    %v2422 = vunpack.c.l.b16 %v2390
    %v2423 = vunpack.c.l.b16 %v2391
    %v2424 = vunpack.c.l.b16 %v2392
    %v2425 = vunpack.c.l.b16 %v2393
    %v2426 = vunpack.c.l.b16 %v2394
    %v2427 = vunpack.c.l.b16 %v2395
    %v2428 = vunpack.c.l.b16 %v2396
    %v2429 = vunpack.c.l.b16 %v2397
    %v2430 = vunpack.c.l.b16 %v2398
    %v2431 = vpack.c.b16 %v2416, %v2415
    %v2432 = vpack.c.b16 %v2418, %v2417
    %v2433 = vpack.c.b16 %v2420, %v2419
    %v2434 = vpack.c.b16 %v2422, %v2421
    %v2435 = vpack.c.b16 %v2424, %v2423
    %v2436 = vpack.c.b16 %v2426, %v2425
    %v2437 = vpack.c.b16 %v2428, %v2427
    %v2438 = vpack.c.b16 %v2430, %v2429
    %2447 = vmatprep.subr.bf16.mxu0 0
    %2448 = vmatpush1.bf16.msra.mxu0 %v2431
    %2449 = vmatprep.subr.bf16.mxu0 0
    %2450 = vmatpush1.bf16.msra.mxu0 %v2432
    %2451 = vmatprep.subr.bf16.mxu0 0
    %2452 = vmatpush1.bf16.msra.mxu0 %v2433
    %2453 = vmatprep.subr.bf16.mxu0 0
    %2454 = vmatpush1.bf16.msra.mxu0 %v2434
    %2455 = vmatprep.subr.bf16.mxu0 0
    %2456 = vmatpush1.bf16.msra.mxu0 %v2435
    %2457 = vmatprep.subr.bf16.mxu0 0
    %2458 = vmatpush1.bf16.msra.mxu0 %v2436
    %2459 = vmatprep.subr.bf16.mxu0 0
    %2460 = vmatpush1.bf16.msra.mxu0 %v2437
    %2461 = vmatprep.subr.bf16.mxu0 0
    %2462 = vmatpush1.bf16.msra.mxu0 %v2438
    %2463 = vmatprep.subr.bf16.mxu0 0
    %2464 = vmatpush1.bf16.msra.mxu0 0
    %2465 = vmatprep.subr.bf16.mxu0 0
    %2466 = vmatpush1.bf16.msra.mxu0 0
    %2467 = vmatprep.subr.bf16.mxu0 0
    %2468 = vmatpush1.bf16.msra.mxu0 0
    %2469 = vmatprep.subr.bf16.mxu0 0
    %2470 = vmatpush1.bf16.msra.mxu0 0
    %2471 = vmatprep.subr.bf16.mxu0 0
    %2472 = vmatpush1.bf16.msra.mxu0 0
    %2473 = vmatprep.subr.bf16.mxu0 0
    %2474 = vmatpush1.bf16.msra.mxu0 0
    %2475 = vmatprep.subr.bf16.mxu0 0
    %2476 = vmatpush1.bf16.msra.mxu0 0
    %2477 = vmatprep.subr.bf16.mxu0 0
    %2478 = vmatpush1.bf16.msra.mxu0 0
    %2479 = vmatprep.mubr.bf16.mxu0 0
    %2480 = vmatmul.mubr.bf16.gmra.mrb[0].mxu0 %v403
    %v2481 = vpop.f32.mrb[0].mxu0
    %v2482 = vadd.f32 0.0, %v2481
    %v2483 = vpop.f32.mrb[0].mxu0
    %v2484 = vpop.f32.mrb[0].mxu0
    %v2485 = vpop.f32.mrb[0].mxu0
    %2486 = vdwg.mxu0
    %v2487 = vmul.f32 %v1585, %v2482
    %v2488 = vadd.f32 %v2382, %v2487
    %v2491 = vunpack.c.l.s4 1966171168
    %v2492 = vunpack.c.0.s8 %v2491
    %v2493 = vlaneseq
    %v2494 = vshrl.u32 %v2493, 7
    %v2495 = vsub.s32 %v2492, %v2494
    %v2496 = vrot.slane %v2488, %v2495
    %v2497 = vcombine.high %v2496, %v2496
    %v2499 = vunpack.c.l.s4 1966171168
    %v2500 = vunpack.c.0.s8 %v2499
    %v2501 = vlaneseq
    %v2502 = vshrl.u32 %v2501, 7
    %v2503 = vsub.s32 %v2500, %v2502
    %v2504 = vrot.slane %v2496, %v2503
    %v2506 = vunpack.c.l.s4 1966171168
    %v2507 = vunpack.c.0.s8 %v2506
    %v2508 = vlaneseq
    %v2509 = vshrl.u32 %v2508, 7
    %v2510 = vsub.s32 %v2507, %v2509
    %v2511 = vrot.slane %v2497, %v2510
    %2514 = vst [vmem:[#allocation8 + $0x2] sm:$0x1] %v2504
    %2515 = vst [vmem:[#allocation8 + $0x6] sm:$0x1] %v2511
    %v2516 = vld [vmem:[#allocation7] sm:$0xf]
    %v2517 = vld [vmem:[#allocation7 + $0x4] sm:$0xf]
    %v2518 = vld [vmem:[#allocation7 + $0x8] sm:$0xf]
    %v2519 = vld [vmem:[#allocation7 + $0xc] sm:$0xf]
    %v2520 = vld [vmem:[#allocation7 + $0x10] sm:$0xf]
    %v2521 = vld [vmem:[#allocation7 + $0x14] sm:$0xf]
    %v2522 = vld [vmem:[#allocation7 + $0x18] sm:$0xf]
    %v2523 = vld [vmem:[#allocation7 + $0x1c] sm:$0xf]
    %v2524 = vld [vmem:[#allocation7 + $0x20] sm:$0xf]
    %v2525 = vld [vmem:[#allocation7 + $0x24] sm:$0xf]
    %v2526 = vld [vmem:[#allocation7 + $0x28] sm:$0xf]
    %v2527 = vld [vmem:[#allocation7 + $0x2c] sm:$0xf]
    %v2528 = vld [vmem:[#allocation7 + $0x30] sm:$0xf]
    %v2529 = vld [vmem:[#allocation7 + $0x34] sm:$0xf]
    %v2530 = vld [vmem:[#allocation7 + $0x38] sm:$0xf]
    %v2531 = vld [vmem:[#allocation7 + $0x3c] sm:$0xf]
    %v2548 = vunpack.c.l.b16 %v2516
    %v2549 = vunpack.c.l.b16 %v2517
    %v2550 = vunpack.c.l.b16 %v2518
    %v2551 = vunpack.c.l.b16 %v2519
    %v2552 = vunpack.c.l.b16 %v2520
    %v2553 = vunpack.c.l.b16 %v2521
    %v2554 = vunpack.c.l.b16 %v2522
    %v2555 = vunpack.c.l.b16 %v2523
    %v2556 = vunpack.c.l.b16 %v2524
    %v2557 = vunpack.c.l.b16 %v2525
    %v2558 = vunpack.c.l.b16 %v2526
    %v2559 = vunpack.c.l.b16 %v2527
    %v2560 = vunpack.c.l.b16 %v2528
    %v2561 = vunpack.c.l.b16 %v2529
    %v2562 = vunpack.c.l.b16 %v2530
    %v2563 = vunpack.c.l.b16 %v2531
    %v2564 = vpack.c.b16 %v2549, %v2548
    %v2565 = vpack.c.b16 %v2551, %v2550
    %v2566 = vpack.c.b16 %v2553, %v2552
    %v2567 = vpack.c.b16 %v2555, %v2554
    %v2568 = vpack.c.b16 %v2557, %v2556
    %v2569 = vpack.c.b16 %v2559, %v2558
    %v2570 = vpack.c.b16 %v2561, %v2560
    %v2571 = vpack.c.b16 %v2563, %v2562
    %2580 = vmatprep.subr.bf16.mxu0 0
    %2581 = vmatpush1.bf16.msra.mxu0 %v2564
    %2582 = vmatprep.subr.bf16.mxu0 0
    %2583 = vmatpush1.bf16.msra.mxu0 %v2565
    %2584 = vmatprep.subr.bf16.mxu0 0
    %2585 = vmatpush1.bf16.msra.mxu0 %v2566
    %2586 = vmatprep.subr.bf16.mxu0 0
    %2587 = vmatpush1.bf16.msra.mxu0 %v2567
    %2588 = vmatprep.subr.bf16.mxu0 0
    %2589 = vmatpush1.bf16.msra.mxu0 %v2568
    %2590 = vmatprep.subr.bf16.mxu0 0
    %2591 = vmatpush1.bf16.msra.mxu0 %v2569
    %2592 = vmatprep.subr.bf16.mxu0 0
    %2593 = vmatpush1.bf16.msra.mxu0 %v2570
    %2594 = vmatprep.subr.bf16.mxu0 0
    %2595 = vmatpush1.bf16.msra.mxu0 %v2571
    %2596 = vmatprep.subr.bf16.mxu0 0
    %2597 = vmatpush1.bf16.msra.mxu0 0
    %2598 = vmatprep.subr.bf16.mxu0 0
    %2599 = vmatpush1.bf16.msra.mxu0 0
    %2600 = vmatprep.subr.bf16.mxu0 0
    %2601 = vmatpush1.bf16.msra.mxu0 0
    %2602 = vmatprep.subr.bf16.mxu0 0
    %2603 = vmatpush1.bf16.msra.mxu0 0
    %2604 = vmatprep.subr.bf16.mxu0 0
    %2605 = vmatpush1.bf16.msra.mxu0 0
    %2606 = vmatprep.subr.bf16.mxu0 0
    %2607 = vmatpush1.bf16.msra.mxu0 0
    %2608 = vmatprep.subr.bf16.mxu0 0
    %2609 = vmatpush1.bf16.msra.mxu0 0
    %2610 = vmatprep.subr.bf16.mxu0 0
    %2611 = vmatpush1.bf16.msra.mxu0 0
    %2612 = vmatprep.mubr.bf16.mxu0 0
    %2613 = vmatmul.mubr.bf16.gmra.mrb[0].mxu0 %v551
    %v2614 = vpop.f32.mrb[0].mxu0
    %v2615 = vadd.f32 0.0, %v2614
    %v2616 = vpop.f32.mrb[0].mxu0
    %v2617 = vpop.f32.mrb[0].mxu0
    %v2618 = vpop.f32.mrb[0].mxu0
    %2619 = vdwg.mxu0
    %v2620 = vmul.f32 %v1253, %v2615
    %v2621 = vld [vmem:[%s1256] sm:$0xf]
    %v2622 = vld [vmem:[%s1256 + $0x4] sm:$0xf]
    %v2623 = vld [vmem:[%s1256 + $0x8] sm:$0xf]
    %v2624 = vld [vmem:[%s1256 + $0xc] sm:$0xf]
    %v2625 = vld [vmem:[%s1256 + $0x10] sm:$0xf]
    %v2626 = vld [vmem:[%s1256 + $0x14] sm:$0xf]
    %v2627 = vld [vmem:[%s1256 + $0x18] sm:$0xf]
    %v2628 = vld [vmem:[%s1256 + $0x1c] sm:$0xf]
    %v2629 = vld [vmem:[%s1256 + $0x20] sm:$0xf]
    %v2630 = vld [vmem:[%s1256 + $0x24] sm:$0xf]
    %v2631 = vld [vmem:[%s1256 + $0x28] sm:$0xf]
    %v2632 = vld [vmem:[%s1256 + $0x2c] sm:$0xf]
    %v2633 = vld [vmem:[%s1256 + $0x30] sm:$0xf]
    %v2634 = vld [vmem:[%s1256 + $0x34] sm:$0xf]
    %v2635 = vld [vmem:[%s1256 + $0x38] sm:$0xf]
    %v2636 = vld [vmem:[%s1256 + $0x3c] sm:$0xf]
    %v2653 = vunpack.c.l.b16 %v2621
    %v2654 = vunpack.c.l.b16 %v2622
    %v2655 = vunpack.c.l.b16 %v2623
    %v2656 = vunpack.c.l.b16 %v2624
    %v2657 = vunpack.c.l.b16 %v2625
    %v2658 = vunpack.c.l.b16 %v2626
    %v2659 = vunpack.c.l.b16 %v2627
    %v2660 = vunpack.c.l.b16 %v2628
    %v2661 = vunpack.c.l.b16 %v2629
    %v2662 = vunpack.c.l.b16 %v2630
    %v2663 = vunpack.c.l.b16 %v2631
    %v2664 = vunpack.c.l.b16 %v2632
    %v2665 = vunpack.c.l.b16 %v2633
    %v2666 = vunpack.c.l.b16 %v2634
    %v2667 = vunpack.c.l.b16 %v2635
    %v2668 = vunpack.c.l.b16 %v2636
    %v2669 = vpack.c.b16 %v2654, %v2653
    %v2670 = vpack.c.b16 %v2656, %v2655
    %v2671 = vpack.c.b16 %v2658, %v2657
    %v2672 = vpack.c.b16 %v2660, %v2659
    %v2673 = vpack.c.b16 %v2662, %v2661
    %v2674 = vpack.c.b16 %v2664, %v2663
    %v2675 = vpack.c.b16 %v2666, %v2665
    %v2676 = vpack.c.b16 %v2668, %v2667
    %2685 = vmatprep.subr.bf16.mxu0 0
    %2686 = vmatpush1.bf16.msra.mxu0 %v2669
    %2687 = vmatprep.subr.bf16.mxu0 0
    %2688 = vmatpush1.bf16.msra.mxu0 %v2670
    %2689 = vmatprep.subr.bf16.mxu0 0
    %2690 = vmatpush1.bf16.msra.mxu0 %v2671
    %2691 = vmatprep.subr.bf16.mxu0 0
    %2692 = vmatpush1.bf16.msra.mxu0 %v2672
    %2693 = vmatprep.subr.bf16.mxu0 0
    %2694 = vmatpush1.bf16.msra.mxu0 %v2673
    %2695 = vmatprep.subr.bf16.mxu0 0
    %2696 = vmatpush1.bf16.msra.mxu0 %v2674
    %2697 = vmatprep.subr.bf16.mxu0 0
    %2698 = vmatpush1.bf16.msra.mxu0 %v2675
    %2699 = vmatprep.subr.bf16.mxu0 0
    %2700 = vmatpush1.bf16.msra.mxu0 %v2676
    %2701 = vmatprep.subr.bf16.mxu0 0
    %2702 = vmatpush1.bf16.msra.mxu0 0
    %2703 = vmatprep.subr.bf16.mxu0 0
    %2704 = vmatpush1.bf16.msra.mxu0 0
    %2705 = vmatprep.subr.bf16.mxu0 0
    %2706 = vmatpush1.bf16.msra.mxu0 0
    %2707 = vmatprep.subr.bf16.mxu0 0
    %2708 = vmatpush1.bf16.msra.mxu0 0
    %2709 = vmatprep.subr.bf16.mxu0 0
    %2710 = vmatpush1.bf16.msra.mxu0 0
    %2711 = vmatprep.subr.bf16.mxu0 0
    %2712 = vmatpush1.bf16.msra.mxu0 0
    %2713 = vmatprep.subr.bf16.mxu0 0
    %2714 = vmatpush1.bf16.msra.mxu0 0
    %2715 = vmatprep.subr.bf16.mxu0 0
    %2716 = vmatpush1.bf16.msra.mxu0 0
    %2717 = vmatprep.mubr.bf16.mxu0 0
    %2718 = vmatmul.mubr.bf16.gmra.mrb[0].mxu0 %v551
    %v2719 = vpop.f32.mrb[0].mxu0
    %v2720 = vadd.f32 0.0, %v2719
    %v2721 = vpop.f32.mrb[0].mxu0
    %v2722 = vpop.f32.mrb[0].mxu0
    %v2723 = vpop.f32.mrb[0].mxu0
    %2724 = vdwg.mxu0
    %v2725 = vmul.f32 %v1363, %v2720
    %v2726 = vadd.f32 %v2620, %v2725
    %v2727 = vld [vmem:[%s1367] sm:$0xf]
    %v2728 = vld [vmem:[%s1367 + $0x4] sm:$0xf]
    %v2729 = vld [vmem:[%s1367 + $0x8] sm:$0xf]
    %v2730 = vld [vmem:[%s1367 + $0xc] sm:$0xf]
    %v2731 = vld [vmem:[%s1367 + $0x10] sm:$0xf]
    %v2732 = vld [vmem:[%s1367 + $0x14] sm:$0xf]
    %v2733 = vld [vmem:[%s1367 + $0x18] sm:$0xf]
    %v2734 = vld [vmem:[%s1367 + $0x1c] sm:$0xf]
    %v2735 = vld [vmem:[%s1367 + $0x20] sm:$0xf]
    %v2736 = vld [vmem:[%s1367 + $0x24] sm:$0xf]
    %v2737 = vld [vmem:[%s1367 + $0x28] sm:$0xf]
    %v2738 = vld [vmem:[%s1367 + $0x2c] sm:$0xf]
    %v2739 = vld [vmem:[%s1367 + $0x30] sm:$0xf]
    %v2740 = vld [vmem:[%s1367 + $0x34] sm:$0xf]
    %v2741 = vld [vmem:[%s1367 + $0x38] sm:$0xf]
    %v2742 = vld [vmem:[%s1367 + $0x3c] sm:$0xf]
    %v2759 = vunpack.c.l.b16 %v2727
    %v2760 = vunpack.c.l.b16 %v2728
    %v2761 = vunpack.c.l.b16 %v2729
    %v2762 = vunpack.c.l.b16 %v2730
    %v2763 = vunpack.c.l.b16 %v2731
    %v2764 = vunpack.c.l.b16 %v2732
    %v2765 = vunpack.c.l.b16 %v2733
    %v2766 = vunpack.c.l.b16 %v2734
    %v2767 = vunpack.c.l.b16 %v2735
    %v2768 = vunpack.c.l.b16 %v2736
    %v2769 = vunpack.c.l.b16 %v2737
    %v2770 = vunpack.c.l.b16 %v2738
    %v2771 = vunpack.c.l.b16 %v2739
    %v2772 = vunpack.c.l.b16 %v2740
    %v2773 = vunpack.c.l.b16 %v2741
    %v2774 = vunpack.c.l.b16 %v2742
    %v2775 = vpack.c.b16 %v2760, %v2759
    %v2776 = vpack.c.b16 %v2762, %v2761
    %v2777 = vpack.c.b16 %v2764, %v2763
    %v2778 = vpack.c.b16 %v2766, %v2765
    %v2779 = vpack.c.b16 %v2768, %v2767
    %v2780 = vpack.c.b16 %v2770, %v2769
    %v2781 = vpack.c.b16 %v2772, %v2771
    %v2782 = vpack.c.b16 %v2774, %v2773
    %2791 = vmatprep.subr.bf16.mxu0 0
    %2792 = vmatpush1.bf16.msra.mxu0 %v2775
    %2793 = vmatprep.subr.bf16.mxu0 0
    %2794 = vmatpush1.bf16.msra.mxu0 %v2776
    %2795 = vmatprep.subr.bf16.mxu0 0
    %2796 = vmatpush1.bf16.msra.mxu0 %v2777
    %2797 = vmatprep.subr.bf16.mxu0 0
    %2798 = vmatpush1.bf16.msra.mxu0 %v2778
    %2799 = vmatprep.subr.bf16.mxu0 0
    %2800 = vmatpush1.bf16.msra.mxu0 %v2779
    %2801 = vmatprep.subr.bf16.mxu0 0
    %2802 = vmatpush1.bf16.msra.mxu0 %v2780
    %2803 = vmatprep.subr.bf16.mxu0 0
    %2804 = vmatpush1.bf16.msra.mxu0 %v2781
    %2805 = vmatprep.subr.bf16.mxu0 0
    %2806 = vmatpush1.bf16.msra.mxu0 %v2782
    %2807 = vmatprep.subr.bf16.mxu0 0
    %2808 = vmatpush1.bf16.msra.mxu0 0
    %2809 = vmatprep.subr.bf16.mxu0 0
    %2810 = vmatpush1.bf16.msra.mxu0 0
    %2811 = vmatprep.subr.bf16.mxu0 0
    %2812 = vmatpush1.bf16.msra.mxu0 0
    %2813 = vmatprep.subr.bf16.mxu0 0
    %2814 = vmatpush1.bf16.msra.mxu0 0
    %2815 = vmatprep.subr.bf16.mxu0 0
    %2816 = vmatpush1.bf16.msra.mxu0 0
    %2817 = vmatprep.subr.bf16.mxu0 0
    %2818 = vmatpush1.bf16.msra.mxu0 0
    %2819 = vmatprep.subr.bf16.mxu0 0
    %2820 = vmatpush1.bf16.msra.mxu0 0
    %2821 = vmatprep.subr.bf16.mxu0 0
    %2822 = vmatpush1.bf16.msra.mxu0 0
    %2823 = vmatprep.mubr.bf16.mxu0 0
    %2824 = vmatmul.mubr.bf16.gmra.mrb[0].mxu0 %v551
    %v2825 = vpop.f32.mrb[0].mxu0
    %v2826 = vadd.f32 0.0, %v2825
    %v2827 = vpop.f32.mrb[0].mxu0
    %v2828 = vpop.f32.mrb[0].mxu0
    %v2829 = vpop.f32.mrb[0].mxu0
    %2830 = vdwg.mxu0
    %v2831 = vmul.f32 %v1474, %v2826
    %v2832 = vadd.f32 %v2726, %v2831
    %v2833 = vld [vmem:[%s1478] sm:$0xf]
    %v2834 = vld [vmem:[%s1478 + $0x4] sm:$0xf]
    %v2835 = vld [vmem:[%s1478 + $0x8] sm:$0xf]
    %v2836 = vld [vmem:[%s1478 + $0xc] sm:$0xf]
    %v2837 = vld [vmem:[%s1478 + $0x10] sm:$0xf]
    %v2838 = vld [vmem:[%s1478 + $0x14] sm:$0xf]
    %v2839 = vld [vmem:[%s1478 + $0x18] sm:$0xf]
    %v2840 = vld [vmem:[%s1478 + $0x1c] sm:$0xf]
    %v2841 = vld [vmem:[%s1478 + $0x20] sm:$0xf]
    %v2842 = vld [vmem:[%s1478 + $0x24] sm:$0xf]
    %v2843 = vld [vmem:[%s1478 + $0x28] sm:$0xf]
    %v2844 = vld [vmem:[%s1478 + $0x2c] sm:$0xf]
    %v2845 = vld [vmem:[%s1478 + $0x30] sm:$0xf]
    %v2846 = vld [vmem:[%s1478 + $0x34] sm:$0xf]
    %v2847 = vld [vmem:[%s1478 + $0x38] sm:$0xf]
    %v2848 = vld [vmem:[%s1478 + $0x3c] sm:$0xf]
    %v2865 = vunpack.c.l.b16 %v2833
    %v2866 = vunpack.c.l.b16 %v2834
    %v2867 = vunpack.c.l.b16 %v2835
    %v2868 = vunpack.c.l.b16 %v2836
    %v2869 = vunpack.c.l.b16 %v2837
    %v2870 = vunpack.c.l.b16 %v2838
    %v2871 = vunpack.c.l.b16 %v2839
    %v2872 = vunpack.c.l.b16 %v2840
    %v2873 = vunpack.c.l.b16 %v2841
    %v2874 = vunpack.c.l.b16 %v2842
    %v2875 = vunpack.c.l.b16 %v2843
    %v2876 = vunpack.c.l.b16 %v2844
    %v2877 = vunpack.c.l.b16 %v2845
    %v2878 = vunpack.c.l.b16 %v2846
    %v2879 = vunpack.c.l.b16 %v2847
    %v2880 = vunpack.c.l.b16 %v2848
    %v2881 = vpack.c.b16 %v2866, %v2865
    %v2882 = vpack.c.b16 %v2868, %v2867
    %v2883 = vpack.c.b16 %v2870, %v2869
    %v2884 = vpack.c.b16 %v2872, %v2871
    %v2885 = vpack.c.b16 %v2874, %v2873
    %v2886 = vpack.c.b16 %v2876, %v2875
    %v2887 = vpack.c.b16 %v2878, %v2877
    %v2888 = vpack.c.b16 %v2880, %v2879
    %2897 = vmatprep.subr.bf16.mxu0 0
    %2898 = vmatpush1.bf16.msra.mxu0 %v2881
    %2899 = vmatprep.subr.bf16.mxu0 0
    %2900 = vmatpush1.bf16.msra.mxu0 %v2882
    %2901 = vmatprep.subr.bf16.mxu0 0
    %2902 = vmatpush1.bf16.msra.mxu0 %v2883
    %2903 = vmatprep.subr.bf16.mxu0 0
    %2904 = vmatpush1.bf16.msra.mxu0 %v2884
    %2905 = vmatprep.subr.bf16.mxu0 0
    %2906 = vmatpush1.bf16.msra.mxu0 %v2885
    %2907 = vmatprep.subr.bf16.mxu0 0
    %2908 = vmatpush1.bf16.msra.mxu0 %v2886
    %2909 = vmatprep.subr.bf16.mxu0 0
    %2910 = vmatpush1.bf16.msra.mxu0 %v2887
    %2911 = vmatprep.subr.bf16.mxu0 0
    %2912 = vmatpush1.bf16.msra.mxu0 %v2888
    %2913 = vmatprep.subr.bf16.mxu0 0
    %2914 = vmatpush1.bf16.msra.mxu0 0
    %2915 = vmatprep.subr.bf16.mxu0 0
    %2916 = vmatpush1.bf16.msra.mxu0 0
    %2917 = vmatprep.subr.bf16.mxu0 0
    %2918 = vmatpush1.bf16.msra.mxu0 0
    %2919 = vmatprep.subr.bf16.mxu0 0
    %2920 = vmatpush1.bf16.msra.mxu0 0
    %2921 = vmatprep.subr.bf16.mxu0 0
    %2922 = vmatpush1.bf16.msra.mxu0 0
    %2923 = vmatprep.subr.bf16.mxu0 0
    %2924 = vmatpush1.bf16.msra.mxu0 0
    %2925 = vmatprep.subr.bf16.mxu0 0
    %2926 = vmatpush1.bf16.msra.mxu0 0
    %2927 = vmatprep.subr.bf16.mxu0 0
    %2928 = vmatpush1.bf16.msra.mxu0 0
    %2929 = vmatprep.mubr.bf16.mxu0 0
    %2930 = vmatmul.mubr.bf16.gmra.mrb[0].mxu0 %v551
    %v2931 = vpop.f32.mrb[0].mxu0
    %v2932 = vadd.f32 0.0, %v2931
    %v2933 = vpop.f32.mrb[0].mxu0
    %v2934 = vpop.f32.mrb[0].mxu0
    %v2935 = vpop.f32.mrb[0].mxu0
    %2936 = vdwg.mxu0
    %v2937 = vmul.f32 %v1585, %v2932
    %v2938 = vadd.f32 %v2832, %v2937
    %v2941 = vunpack.c.l.s4 1966171168
    %v2942 = vunpack.c.0.s8 %v2941
    %v2943 = vlaneseq
    %v2944 = vshrl.u32 %v2943, 7
    %v2945 = vsub.s32 %v2942, %v2944
    %v2946 = vrot.slane %v2938, %v2945
    %v2947 = vcombine.high %v2946, %v2946
    %v2949 = vunpack.c.l.s4 1966171168
    %v2950 = vunpack.c.0.s8 %v2949
    %v2951 = vlaneseq
    %v2952 = vshrl.u32 %v2951, 7
    %v2953 = vsub.s32 %v2950, %v2952
    %v2954 = vrot.slane %v2946, %v2953
    %v2956 = vunpack.c.l.s4 1966171168
    %v2957 = vunpack.c.0.s8 %v2956
    %v2958 = vlaneseq
    %v2959 = vshrl.u32 %v2958, 7
    %v2960 = vsub.s32 %v2957, %v2959
    %v2961 = vrot.slane %v2947, %v2960
    %2964 = vst [vmem:[#allocation8 + $0x3] sm:$0x1] %v2954
    %2965 = vst [vmem:[#allocation8 + $0x7] sm:$0x1] %v2961
    // Predicated region
    $region46: #{tpu_custom_call.1} parent=1 // pred_check
      _
    $region47: #{tpu_custom_call.1} parent=1 // pred_check_branch
      %2967 = sbr.rel (0) target = $region49
    $region48: #{tpu_custom_call.1} parent=1 // pred_region
      %s2969 = ssub.s32 128, 128
      %2970 = vsyncadd [#allocation4], %s2969
      %s2971 = sshll.u32 [#allocation8], 4
      %s2972 = int_to_ptr.vmem [resolvable:$true] %s2971
      %2977 = dma.vmem_to_hbm [thread:$0]  %s2972, 128, %s8, [#allocation4], 64, 64, 4
    $region49: #{tpu_custom_call.1} parent=1 // pred_fallthru
      _
    // Predicated region
    $region50: #{tpu_custom_call.1} parent=1 // pred_check
      _
    $region51: #{tpu_custom_call.1} parent=1 // pred_check_branch
      %2979 = sbr.rel (0) target = $region53
    $region52: #{tpu_custom_call.1} parent=1 // pred_region
      %2980 = dma.done [#allocation4], 128
    $region53: #{tpu_custom_call.1} parent=1 // pred_fallthru
      _
    %2981 = vsyncpa [#allocation3], 1
    %2982 = vsyncpa [#allocation6], 1
    %2983 = vsyncpa [#allocation4], 1

</llo_original>
